<compile_context>
chip_gen: v7x
topology: tpu7x:2x2x1
jax: 0.10.0
libtpu: 0.0.40
codegen_flags: <defaults>
</compile_context>

<pallas_src>
import jax
import jax.numpy as jnp
from jax.experimental import pallas as pl
from jax.experimental.pallas import tpu as pltpu

D_IN = 512          # flattened input features (fc1 input)
H1 = 512            # fc1 output
H2 = 256            # fc1_1 output
H3 = 256            # fc1_2 output (the "feature")
NUM_CLASSES = 15
BN_EPS = 1e-5
LANES = 128
SUBLANES = 8


def _mlp_kernel(
    x_ref,      # (Bp, 512)  bf16  flattened input
    w1_ref,     # (512, 512) bf16  fc1^T with BN folded
    b1_ref,     # (1, 512)   f32   folded BN bias
    w2_ref,     # (512, 256) bf16  fc1_1^T with BN folded
    b2_ref,     # (1, 256)   f32
    w3_ref,     # (256, 256) bf16  fc1_2^T with BN folded
    b3_ref,     # (1, 256)   f32
    w4_ref,     # (256, Cp)  bf16  fc2^T, class dim padded to 128 lanes
    feat_ref,   # (Bp, 256)  f32   post-ReLU feature (return_feature path)
    y_ref,      # (Bp, Cp)   f32   logits (padded)
):
    x = x_ref[...]                                                       # bf16
    z1 = jnp.dot(x, w1_ref[...], preferred_element_type=jnp.float32) + b1_ref[...]
    a1 = jnp.maximum(z1, 0.0).astype(jnp.bfloat16)

    z2 = jnp.dot(a1, w2_ref[...], preferred_element_type=jnp.float32) + b2_ref[...]
    a2 = jnp.maximum(z2, 0.0).astype(jnp.bfloat16)

    z3 = jnp.dot(a2, w3_ref[...], preferred_element_type=jnp.float32) + b3_ref[...]
    a3 = jnp.maximum(z3, 0.0)                                            # f32 feature

    y = jnp.dot(a3.astype(jnp.bfloat16), w4_ref[...],
                preferred_element_type=jnp.float32)

    feat_ref[...] = a3.astype(feat_ref.dtype)
    y_ref[...] = y.astype(y_ref.dtype)


def _fold_bn(w, gamma, beta, rmean, rvar):
    """Fold eval-mode BatchNorm1d that follows a bias-free Linear(w)."""
    scale = gamma * jax.lax.rsqrt(rvar + BN_EPS)       # (out,)
    w_eff_t = w.T * scale[None, :]                     # (in, out)
    b_eff = beta - rmean * scale                       # (out,)
    return w_eff_t, b_eff


def classifier_spk_forward(x, params, return_feature=False):
    """x: (B, ...) with prod(...)==512 -> logits (B, NUM_CLASSES)."""
    B = x.shape[0]
    xf = x.reshape(B, -1).astype(jnp.float32)
    assert xf.shape[1] == D_IN, f"flattened dim must be {D_IN}"

    # Fold BN into the linears (eval mode) and transpose for (B,K)@(K,N).
    w1_t, b1 = _fold_bn(params["fc1_w"],   params["bn1_g"],   params["bn1_b"],
                        params["bn1_rm"],  params["bn1_rv"])
    w2_t, b2 = _fold_bn(params["fc1_1_w"], params["bn1_1_g"], params["bn1_1_b"],
                        params["bn1_1_rm"], params["bn1_1_rv"])
    w3_t, b3 = _fold_bn(params["fc1_2_w"], params["bn1_2_g"], params["bn1_2_b"],
                        params["bn1_2_rm"], params["bn1_2_rv"])
    w4_t = params["fc2_w"].T                           # (256, C)

    # Lane-dense logits: pad class dim to a multiple of 128.
    n_cls = w4_t.shape[1]
    n_cls_pad = pl.cdiv(n_cls, LANES) * LANES
    w4_t = jnp.pad(w4_t, ((0, 0), (0, n_cls_pad - n_cls)))

    # Sublane-dense batch: pad rows to a multiple of 8.
    b_pad = pl.cdiv(B, SUBLANES) * SUBLANES
    x_p = jnp.pad(xf, ((0, b_pad - B), (0, 0))).astype(jnp.bfloat16)

    w1_bf = w1_t.astype(jnp.bfloat16)
    w2_bf = w2_t.astype(jnp.bfloat16)
    w3_bf = w3_t.astype(jnp.bfloat16)
    w4_bf = w4_t.astype(jnp.bfloat16)
    b1_r = b1.reshape(1, -1).astype(jnp.float32)
    b2_r = b2.reshape(1, -1).astype(jnp.float32)
    b3_r = b3.reshape(1, -1).astype(jnp.float32)

    full = lambda a: pl.BlockSpec(a.shape, lambda i: (0, 0))

    feat, logits = pl.pallas_call(
        _mlp_kernel,
        out_shape=(jax.ShapeDtypeStruct((b_pad, H3), jnp.float32),
                   jax.ShapeDtypeStruct((b_pad, n_cls_pad), jnp.float32)),
        grid_spec=pltpu.PrefetchScalarGridSpec(
            num_scalar_prefetch=0,
            grid=(1,),
            in_specs=[full(x_p),
                      full(w1_bf), full(b1_r),
                      full(w2_bf), full(b2_r),
                      full(w3_bf), full(b3_r),
                      full(w4_bf)],
            out_specs=[pl.BlockSpec((b_pad, H3), lambda i: (0, 0)),
                       pl.BlockSpec((b_pad, n_cls_pad), lambda i: (0, 0))],
        ),
        compiler_params=pltpu.CompilerParams(
            dimension_semantics=("arbitrary",),
            vmem_limit_bytes=32 * 1024 * 1024,
        ),
    )(x_p, w1_bf, b1_r, w2_bf, b2_r, w3_bf, b3_r, w4_bf)

    y = logits[:B, :n_cls]
    if return_feature:
        return feat[:B], y
    return y


def make_params(key, num_classes=NUM_CLASSES):
    ks = jax.random.split(key, 16)
    u = lambda k, shape, fan_in: jax.random.uniform(
        k, shape, jnp.float32, -1.0 / jnp.sqrt(fan_in), 1.0 / jnp.sqrt(fan_in))
    bn = lambda k, n: dict(
        g=jax.random.uniform(k, (n,), jnp.float32, 0.5, 1.5),
        b=0.1 * jax.random.normal(jax.random.fold_in(k, 1), (n,), jnp.float32),
        rm=0.1 * jax.random.normal(jax.random.fold_in(k, 2), (n,), jnp.float32),
        rv=jax.random.uniform(jax.random.fold_in(k, 3), (n,), jnp.float32, 0.5, 1.5),
    )
    bn1, bn11, bn12 = bn(ks[4], H1), bn(ks[5], H2), bn(ks[6], H3)
    return {
        "fc1_w":   u(ks[0], (H1, D_IN), D_IN),        # (512, 512)
        "fc1_1_w": u(ks[1], (H2, H1), H1),            # (256, 512)
        "fc1_2_w": u(ks[2], (H3, H2), H2),            # (256, 256)
        "fc2_w":   u(ks[3], (num_classes, H3), H3),   # (C, 256)
        "bn1_g": bn1["g"],   "bn1_b": bn1["b"],   "bn1_rm": bn1["rm"],   "bn1_rv": bn1["rv"],
        "bn1_1_g": bn11["g"], "bn1_1_b": bn11["b"], "bn1_1_rm": bn11["rm"], "bn1_1_rv": bn11["rv"],
        "bn1_2_g": bn12["g"], "bn1_2_b": bn12["b"], "bn1_2_rm": bn12["rm"], "bn1_2_rv": bn12["rv"],
    }


def reference_forward(x, p):
    """Pure-JAX f32 reference of the PyTorch forward (eval-mode BN)."""
    B = x.shape[0]
    h = x.reshape(B, -1).astype(jnp.float32)

    def lin_bn_relu(h, w, g, b, rm, rv):
        z = h @ w.T
        z = (z - rm) / jnp.sqrt(rv + BN_EPS) * g + b
        return jnp.maximum(z, 0.0)

    h = lin_bn_relu(h, p["fc1_w"],   p["bn1_g"],   p["bn1_b"],   p["bn1_rm"],   p["bn1_rv"])
    h = lin_bn_relu(h, p["fc1_1_w"], p["bn1_1_g"], p["bn1_1_b"], p["bn1_1_rm"], p["bn1_1_rv"])
    h = lin_bn_relu(h, p["fc1_2_w"], p["bn1_2_g"], p["bn1_2_b"], p["bn1_2_rm"], p["bn1_2_rv"])
    return h, h @ p["fc2_w"].T


if __name__ == "__main__":
    key = jax.random.PRNGKey(0)
    k_x, k_p = jax.random.split(key)

    B = 4
    x = jax.random.normal(k_x, (B, 2, 16, 16), jnp.float32)   # flattens to 512
    params = make_params(k_p)

    feat, y = classifier_spk_forward(x, params, return_feature=True)
    feat = jax.block_until_ready(feat)
    y = jax.block_until_ready(y)

    feat_ref, y_ref = reference_forward(x, params)
    feat_ref = jax.block_until_ready(feat_ref)
    y_ref = jax.block_until_ready(y_ref)

    err_y = float(jnp.max(jnp.abs(y - y_ref)))
    err_f = float(jnp.max(jnp.abs(feat - feat_ref)))
    if err_y > 5e-2 or err_f > 5e-2:
        raise AssertionError(f"mismatch vs reference: logits {err_y}, feat {err_f}")

    print("KERNEL_OK")
</pallas_src>

<mosaic_0001>
module attributes {stable_mosaic.version = 11 : i64} {
  func.func @_mlp_kernel(%arg0: i32, %arg1: memref<8x512xbf16, #tpu.memory_space<vmem>>, %arg2: memref<512x512xbf16, #tpu.memory_space<vmem>>, %arg3: memref<1x512xf32, #tpu.memory_space<vmem>>, %arg4: memref<512x256xbf16, #tpu.memory_space<vmem>>, %arg5: memref<1x256xf32, #tpu.memory_space<vmem>>, %arg6: memref<256x256xbf16, #tpu.memory_space<vmem>>, %arg7: memref<1x256xf32, #tpu.memory_space<vmem>>, %arg8: memref<256x128xbf16, #tpu.memory_space<vmem>>, %arg9: memref<8x256xf32, #tpu.memory_space<vmem>>, %arg10: memref<8x128xf32, #tpu.memory_space<vmem>>) attributes {dimension_semantics = [#tpu.dimension_semantics<arbitrary>], iteration_bounds = array<i64: 1>, scalar_prefetch = 0 : i64, scratch_operands = 0 : i64, tpu.core_type = #tpu.core_type<tc>, window_params = [{pipeline_mode = #tpu.pipeline_mode<synchronous>, transform_indices = @transform_0, window_bounds = array<i64: 8, 512>}, {pipeline_mode = #tpu.pipeline_mode<synchronous>, transform_indices = @transform_1, window_bounds = array<i64: 512, 512>}, {pipeline_mode = #tpu.pipeline_mode<synchronous>, transform_indices = @transform_2, window_bounds = array<i64: 1, 512>}, {pipeline_mode = #tpu.pipeline_mode<synchronous>, transform_indices = @transform_3, window_bounds = array<i64: 512, 256>}, {pipeline_mode = #tpu.pipeline_mode<synchronous>, transform_indices = @transform_4, window_bounds = array<i64: 1, 256>}, {pipeline_mode = #tpu.pipeline_mode<synchronous>, transform_indices = @transform_5, window_bounds = array<i64: 256, 256>}, {pipeline_mode = #tpu.pipeline_mode<synchronous>, transform_indices = @transform_6, window_bounds = array<i64: 1, 256>}, {pipeline_mode = #tpu.pipeline_mode<synchronous>, transform_indices = @transform_7, window_bounds = array<i64: 256, 128>}, {pipeline_mode = #tpu.pipeline_mode<synchronous>, transform_indices = @transform_8, window_bounds = array<i64: 8, 256>}, {pipeline_mode = #tpu.pipeline_mode<synchronous>, transform_indices = @transform_9, window_bounds = array<i64: 8, 128>}]} {
    %c0 = arith.constant 0 : index
    %c0_0 = arith.constant 0 : index
    %0 = vector.load %arg1[%c0, %c0_0] : memref<8x512xbf16, #tpu.memory_space<vmem>>, vector<8x512xbf16>
    %c0_1 = arith.constant 0 : index
    %c0_2 = arith.constant 0 : index
    %1 = vector.load %arg2[%c0_1, %c0_2] : memref<512x512xbf16, #tpu.memory_space<vmem>>, vector<512x512xbf16>
    %cst = arith.constant dense<0.000000e+00> : vector<8x512xf32>
    %2 = tpu.matmul %0, %1, %cst {dimension_numbers = #tpu.dot_dimension_numbers<[1], [0], [0], [1], [0, 0, 1, 1], [], []>} : vector<8x512xbf16>, vector<512x512xbf16>, vector<8x512xf32> -> vector<8x512xf32>
    %c0_3 = arith.constant 0 : index
    %c0_4 = arith.constant 0 : index
    %3 = vector.load %arg3[%c0_3, %c0_4] : memref<1x512xf32, #tpu.memory_space<vmem>>, vector<1x512xf32>
    %4 = vector.broadcast %3 : vector<1x512xf32> to vector<8x512xf32>
    %5 = arith.addf %2, %4 : vector<8x512xf32>
    %cst_5 = arith.constant 0.000000e+00 : f32
    %6 = vector.broadcast %cst_5 : f32 to vector<8x512xf32>
    %7 = arith.maximumf %5, %6 : vector<8x512xf32>
    %8 = arith.truncf %7 : vector<8x512xf32> to vector<8x512xbf16>
    %c0_6 = arith.constant 0 : index
    %c0_7 = arith.constant 0 : index
    %9 = vector.load %arg4[%c0_6, %c0_7] : memref<512x256xbf16, #tpu.memory_space<vmem>>, vector<512x256xbf16>
    %cst_8 = arith.constant dense<0.000000e+00> : vector<8x256xf32>
    %10 = tpu.matmul %8, %9, %cst_8 {dimension_numbers = #tpu.dot_dimension_numbers<[1], [0], [0], [1], [0, 0, 1, 1], [], []>} : vector<8x512xbf16>, vector<512x256xbf16>, vector<8x256xf32> -> vector<8x256xf32>
    %c0_9 = arith.constant 0 : index
    %c0_10 = arith.constant 0 : index
    %11 = vector.load %arg5[%c0_9, %c0_10] : memref<1x256xf32, #tpu.memory_space<vmem>>, vector<1x256xf32>
    %12 = vector.broadcast %11 : vector<1x256xf32> to vector<8x256xf32>
    %13 = arith.addf %10, %12 : vector<8x256xf32>
    %cst_11 = arith.constant 0.000000e+00 : f32
    %14 = vector.broadcast %cst_11 : f32 to vector<8x256xf32>
    %15 = arith.maximumf %13, %14 : vector<8x256xf32>
    %16 = arith.truncf %15 : vector<8x256xf32> to vector<8x256xbf16>
    %c0_12 = arith.constant 0 : index
    %c0_13 = arith.constant 0 : index
    %17 = vector.load %arg6[%c0_12, %c0_13] : memref<256x256xbf16, #tpu.memory_space<vmem>>, vector<256x256xbf16>
    %cst_14 = arith.constant dense<0.000000e+00> : vector<8x256xf32>
    %18 = tpu.matmul %16, %17, %cst_14 {dimension_numbers = #tpu.dot_dimension_numbers<[1], [0], [0], [1], [0, 0, 1, 1], [], []>} : vector<8x256xbf16>, vector<256x256xbf16>, vector<8x256xf32> -> vector<8x256xf32>
    %c0_15 = arith.constant 0 : index
    %c0_16 = arith.constant 0 : index
    %19 = vector.load %arg7[%c0_15, %c0_16] : memref<1x256xf32, #tpu.memory_space<vmem>>, vector<1x256xf32>
    %20 = vector.broadcast %19 : vector<1x256xf32> to vector<8x256xf32>
    %21 = arith.addf %18, %20 : vector<8x256xf32>
    %cst_17 = arith.constant 0.000000e+00 : f32
    %22 = vector.broadcast %cst_17 : f32 to vector<8x256xf32>
    %23 = arith.maximumf %21, %22 : vector<8x256xf32>
    %24 = arith.truncf %23 : vector<8x256xf32> to vector<8x256xbf16>
    %c0_18 = arith.constant 0 : index
    %c0_19 = arith.constant 0 : index
    %25 = vector.load %arg8[%c0_18, %c0_19] : memref<256x128xbf16, #tpu.memory_space<vmem>>, vector<256x128xbf16>
    %cst_20 = arith.constant dense<0.000000e+00> : vector<8x128xf32>
    %26 = tpu.matmul %24, %25, %cst_20 {dimension_numbers = #tpu.dot_dimension_numbers<[1], [0], [0], [1], [0, 0, 1, 1], [], []>} : vector<8x256xbf16>, vector<256x128xbf16>, vector<8x128xf32> -> vector<8x128xf32>
    %c0_21 = arith.constant 0 : index
    %c0_22 = arith.constant 0 : index
    %27 = vector.load %arg9[%c0_21, %c0_22] : memref<8x256xf32, #tpu.memory_space<vmem>>, vector<8x256xf32>
    tpu.vector_store %arg9[%c0_21, %c0_22], %23 {strides = array<i32>} : memref<8x256xf32, #tpu.memory_space<vmem>>, vector<8x256xf32>,
    %c0_23 = arith.constant 0 : index
    %c0_24 = arith.constant 0 : index
    %28 = vector.load %arg10[%c0_23, %c0_24] : memref<8x128xf32, #tpu.memory_space<vmem>>, vector<8x128xf32>
    tpu.vector_store %arg10[%c0_23, %c0_24], %26 {strides = array<i32>} : memref<8x128xf32, #tpu.memory_space<vmem>>, vector<8x128xf32>,
    return
  }
  func.func @transform_0(%arg0: i32) -> (i32, i32) {
    %c0_i32 = arith.constant 0 : i32
    %c0_i32_0 = arith.constant 0 : i32
    %c0_i32_1 = arith.constant 0 : i32
    return %c0_i32, %c0_i32_0 : i32, i32
  }
  func.func @transform_1(%arg0: i32) -> (i32, i32) {
    %c0_i32 = arith.constant 0 : i32
    %c0_i32_0 = arith.constant 0 : i32
    %c0_i32_1 = arith.constant 0 : i32
    return %c0_i32, %c0_i32_0 : i32, i32
  }
  func.func @transform_2(%arg0: i32) -> (i32, i32) {
    %c0_i32 = arith.constant 0 : i32
    %c0_i32_0 = arith.constant 0 : i32
    %c0_i32_1 = arith.constant 0 : i32
    return %c0_i32, %c0_i32_0 : i32, i32
  }
  func.func @transform_3(%arg0: i32) -> (i32, i32) {
    %c0_i32 = arith.constant 0 : i32
    %c0_i32_0 = arith.constant 0 : i32
    %c0_i32_1 = arith.constant 0 : i32
    return %c0_i32, %c0_i32_0 : i32, i32
  }
  func.func @transform_4(%arg0: i32) -> (i32, i32) {
    %c0_i32 = arith.constant 0 : i32
    %c0_i32_0 = arith.constant 0 : i32
    %c0_i32_1 = arith.constant 0 : i32
    return %c0_i32, %c0_i32_0 : i32, i32
  }
  func.func @transform_5(%arg0: i32) -> (i32, i32) {
    %c0_i32 = arith.constant 0 : i32
    %c0_i32_0 = arith.constant 0 : i32
    %c0_i32_1 = arith.constant 0 : i32
    return %c0_i32, %c0_i32_0 : i32, i32
  }
  func.func @transform_6(%arg0: i32) -> (i32, i32) {
    %c0_i32 = arith.constant 0 : i32
    %c0_i32_0 = arith.constant 0 : i32
    %c0_i32_1 = arith.constant 0 : i32
    return %c0_i32, %c0_i32_0 : i32, i32
  }
  func.func @transform_7(%arg0: i32) -> (i32, i32) {
    %c0_i32 = arith.constant 0 : i32
    %c0_i32_0 = arith.constant 0 : i32
    %c0_i32_1 = arith.constant 0 : i32
    return %c0_i32, %c0_i32_0 : i32, i32
  }
  func.func @transform_8(%arg0: i32) -> (i32, i32) {
    %c0_i32 = arith.constant 0 : i32
    %c0_i32_0 = arith.constant 0 : i32
    %c0_i32_1 = arith.constant 0 : i32
    return %c0_i32, %c0_i32_0 : i32, i32
  }
  func.func @transform_9(%arg0: i32) -> (i32, i32) {
    %c0_i32 = arith.constant 0 : i32
    %c0_i32_0 = arith.constant 0 : i32
    %c0_i32_1 = arith.constant 0 : i32
    return %c0_i32, %c0_i32_0 : i32, i32
  }
}

</mosaic_0001>

<llo_original>
// kernel: tpu_custom_call.1
$region0: #{tpu_custom_call.1}
  #allocation0 [shape = 'u32[]', space=smem, size = 0x4, offset = 0x4, fixed_abs, tag = 'smem constant byte address 0x4 - core index']
  #allocation1 [shape = 'u32[144,128]{1,0:T(1,128)}', space=vmem, size = 0x12000, scoped, tag = 'internal scratch']
  %s0 = inlined_call_operand.hbm [shape: bf16[8,512], index: 0, kind: input, shape index: {}]
  %s1 = inlined_call_operand.hbm [shape: bf16[512,512], index: 1, kind: input, shape index: {}]
  %s2 = inlined_call_operand.vmem [shape: f32[1,512], index: 2, kind: input, shape index: {}]
  %s3 = inlined_call_operand.hbm [shape: bf16[512,256], index: 3, kind: input, shape index: {}]
  %s4 = inlined_call_operand.vmem [shape: f32[1,256], index: 4, kind: input, shape index: {}]
  %s5 = inlined_call_operand.hbm [shape: bf16[256,256], index: 5, kind: input, shape index: {}]
  %s6 = inlined_call_operand.vmem [shape: f32[1,256], index: 6, kind: input, shape index: {}]
  %s7 = inlined_call_operand.hbm [shape: bf16[256,128], index: 7, kind: input, shape index: {}]
  %s8 = inlined_call_operand.hbm [shape: f32[8,256], index: 8, kind: output, shape index: {0}]
  %s9 = inlined_call_operand.hbm [shape: f32[8,128], index: 9, kind: output, shape index: {1}]
  %10 = xla_tuple %s8, %s9
  %s11 = sld [smem:[#allocation0]]
  $region70: #{tpu_custom_call.1} parent=0
    _
  %s13 = ssub.s32 1, %s11
  %s14 = scalar_select 0, %s13, %s11
  $region1: #{tpu_custom_call.1} parent=0
    #allocation2 [shape = 'u8[8192]{0}', space=vmem, size = 0x2000, scoped, tag = 'input window, operand 0, single buffered']
    #allocation3 [shape = 's32[1]{0}', space=sflag, size = 0x4, scoped, tag = 'scoped memory for tpu_custom_call.1']
    #allocation4 [shape = 's32[1]{0}', space=sflag, size = 0x4, scoped, tag = 'scoped memory for tpu_custom_call.1']
    #allocation5 [shape = 'u8[524288]{0}', space=vmem, size = 0x80000, scoped, tag = 'input window, operand 1, single buffered']
    #allocation6 [shape = 's32[1]{0}', space=sflag, size = 0x4, scoped, tag = 'scoped memory for tpu_custom_call.1']
    #allocation7 [shape = 'u8[262144]{0}', space=vmem, size = 0x40000, scoped, tag = 'input window, operand 3, single buffered']
    #allocation8 [shape = 'u8[131072]{0}', space=vmem, size = 0x20000, scoped, tag = 'input window, operand 5, single buffered']
    #allocation9 [shape = 's32[1]{0}', space=sflag, size = 0x4, scoped, tag = 'scoped memory for tpu_custom_call.1']
    #allocation10 [shape = 'u8[65536]{0}', space=vmem, size = 0x10000, scoped, tag = 'input window, operand 7, single buffered']
    #allocation11 [shape = 'u8[8192]{0}', space=vmem, size = 0x2000, scoped, tag = 'output window, operand 0, single buffered']
    #allocation12 [shape = 'u8[4096]{0}', space=vmem, size = 0x1000, scoped, tag = 'output window, operand 1, single buffered']
    #allocation13 [shape = 's32[1]{0}', space=sflag, size = 0x4, scoped, tag = 'scoped memory for tpu_custom_call.1']
    %15 = vsyncpa [#allocation3], 0
    %16 = vsyncpa [#allocation6], 0
    %17 = vsyncpa [#allocation9], 0
    %18 = vsyncpa [#allocation4], 0
    %19 = vsyncpa [#allocation13], 0
    // Predicated region
    $region2: #{tpu_custom_call.1} parent=1 // pred_check
      _
    $region3: #{tpu_custom_call.1} parent=1 // pred_check_branch
      %21 = sbr.rel (0) target = $region5
    $region4: #{tpu_custom_call.1} parent=1 // pred_region
      %s23 = ssub.s32 256, 256
      %24 = vsyncadd [#allocation3], %s23
      %s26 = sshll.u32 [#allocation2], 4
      %s27 = int_to_ptr.vmem [resolvable:$true] %s26
      %29 = dma.hbm_to_vmem [thread:$0]  %s0, 256, %s27, [#allocation3]
    $region5: #{tpu_custom_call.1} parent=1 // pred_fallthru
      _
    // Predicated region
    $region6: #{tpu_custom_call.1} parent=1 // pred_check
      _
    $region7: #{tpu_custom_call.1} parent=1 // pred_check_branch
      %31 = sbr.rel (0) target = $region9
    $region8: #{tpu_custom_call.1} parent=1 // pred_region
      %s33 = ssub.s32 16384, 16384
      %34 = vsyncadd [#allocation6], %s33
      %s35 = sshll.u32 [#allocation5], 4
      %s36 = int_to_ptr.vmem [resolvable:$true] %s35
      %41 = dma.hbm_to_vmem [thread:$0]  %s1, 16384, %s36, [#allocation6], 256, 256, 16
    $region9: #{tpu_custom_call.1} parent=1 // pred_fallthru
      _
    // Predicated region
    $region10: #{tpu_custom_call.1} parent=1 // pred_check
      _
    $region11: #{tpu_custom_call.1} parent=1 // pred_check_branch
      %43 = sbr.rel (0) target = $region13
    $region12: #{tpu_custom_call.1} parent=1 // pred_region
      _
    $region13: #{tpu_custom_call.1} parent=1 // pred_fallthru
      _
    // Predicated region
    $region14: #{tpu_custom_call.1} parent=1 // pred_check
      _
    $region15: #{tpu_custom_call.1} parent=1 // pred_check_branch
      %45 = sbr.rel (0) target = $region17
    $region16: #{tpu_custom_call.1} parent=1 // pred_region
      %s47 = ssub.s32 8192, 8192
      %48 = vsyncadd [#allocation6], %s47
      %s49 = sshll.u32 [#allocation7], 4
      %s50 = int_to_ptr.vmem [resolvable:$true] %s49
      %55 = dma.hbm_to_vmem [thread:$0]  %s3, 8192, %s50, [#allocation6], 128, 128, 8
    $region17: #{tpu_custom_call.1} parent=1 // pred_fallthru
      _
    // Predicated region
    $region18: #{tpu_custom_call.1} parent=1 // pred_check
      _
    $region19: #{tpu_custom_call.1} parent=1 // pred_check_branch
      %57 = sbr.rel (0) target = $region21
    $region20: #{tpu_custom_call.1} parent=1 // pred_region
      _
    $region21: #{tpu_custom_call.1} parent=1 // pred_fallthru
      _
    // Predicated region
    $region22: #{tpu_custom_call.1} parent=1 // pred_check
      _
    $region23: #{tpu_custom_call.1} parent=1 // pred_check_branch
      %59 = sbr.rel (0) target = $region25
    $region24: #{tpu_custom_call.1} parent=1 // pred_region
      %s61 = ssub.s32 4096, 4096
      %62 = vsyncadd [#allocation9], %s61
      %s63 = sshll.u32 [#allocation8], 4
      %s64 = int_to_ptr.vmem [resolvable:$true] %s63
      %69 = dma.hbm_to_vmem [thread:$0]  %s5, 4096, %s64, [#allocation9], 128, 128, 8
    $region25: #{tpu_custom_call.1} parent=1 // pred_fallthru
      _
    // Predicated region
    $region26: #{tpu_custom_call.1} parent=1 // pred_check
      _
    $region27: #{tpu_custom_call.1} parent=1 // pred_check_branch
      %71 = sbr.rel (0) target = $region29
    $region28: #{tpu_custom_call.1} parent=1 // pred_region
      _
    $region29: #{tpu_custom_call.1} parent=1 // pred_fallthru
      _
    // Predicated region
    $region30: #{tpu_custom_call.1} parent=1 // pred_check
      _
    $region31: #{tpu_custom_call.1} parent=1 // pred_check_branch
      %73 = sbr.rel (0) target = $region33
    $region32: #{tpu_custom_call.1} parent=1 // pred_region
      %s75 = ssub.s32 2048, 2048
      %76 = vsyncadd [#allocation9], %s75
      %s77 = sshll.u32 [#allocation10], 4
      %s78 = int_to_ptr.vmem [resolvable:$true] %s77
      %83 = dma.hbm_to_vmem [thread:$0]  %s7, 2048, %s78, [#allocation9], 64, 64, 4
    $region33: #{tpu_custom_call.1} parent=1 // pred_fallthru
      _
    // Predicated region
    $region34: #{tpu_custom_call.1} parent=1 // pred_check
      _
    $region35: #{tpu_custom_call.1} parent=1 // pred_check_branch
      %85 = sbr.rel (0) target = $region37
    $region36: #{tpu_custom_call.1} parent=1 // pred_region
      %86 = dma.done [#allocation3], 256
    $region37: #{tpu_custom_call.1} parent=1 // pred_fallthru
      _
    // Predicated region
    $region38: #{tpu_custom_call.1} parent=1 // pred_check
      _
    $region39: #{tpu_custom_call.1} parent=1 // pred_check_branch
      %88 = sbr.rel (0) target = $region41
    $region40: #{tpu_custom_call.1} parent=1 // pred_region
      %89 = dma.done [#allocation6], 16384
    $region41: #{tpu_custom_call.1} parent=1 // pred_fallthru
      _
    // Predicated region
    $region42: #{tpu_custom_call.1} parent=1 // pred_check
      _
    $region43: #{tpu_custom_call.1} parent=1 // pred_check_branch
      %91 = sbr.rel (0) target = $region45
    $region44: #{tpu_custom_call.1} parent=1 // pred_region
      %92 = dma.done [#allocation6], 8192
    $region45: #{tpu_custom_call.1} parent=1 // pred_fallthru
      _
    // Predicated region
    $region46: #{tpu_custom_call.1} parent=1 // pred_check
      _
    $region47: #{tpu_custom_call.1} parent=1 // pred_check_branch
      %94 = sbr.rel (0) target = $region49
    $region48: #{tpu_custom_call.1} parent=1 // pred_region
      %95 = dma.done [#allocation9], 4096
    $region49: #{tpu_custom_call.1} parent=1 // pred_fallthru
      _
    // Predicated region
    $region50: #{tpu_custom_call.1} parent=1 // pred_check
      _
    $region51: #{tpu_custom_call.1} parent=1 // pred_check_branch
      %97 = sbr.rel (0) target = $region53
    $region52: #{tpu_custom_call.1} parent=1 // pred_region
      %98 = dma.done [#allocation9], 2048
    $region53: #{tpu_custom_call.1} parent=1 // pred_fallthru
      _
    %v100 = vld [vmem:[#allocation2] sm:$0xff]
    %v101 = vld [vmem:[#allocation2 + $0x8] sm:$0xff]
    %v102 = vld [vmem:[#allocation5] sm:$0xff]
    %v103 = vld [vmem:[#allocation5 + $0x8] sm:$0xff]
    %v104 = vld [vmem:[#allocation5 + $0x10] sm:$0xff]
    %v105 = vld [vmem:[#allocation5 + $0x18] sm:$0xff]
    %v106 = vld [vmem:[#allocation5 + $0x20] sm:$0xff]
    %v107 = vld [vmem:[#allocation5 + $0x28] sm:$0xff]
    %v108 = vld [vmem:[#allocation5 + $0x30] sm:$0xff]
    %v109 = vld [vmem:[#allocation5 + $0x38] sm:$0xff]
    %v110 = vld [vmem:[#allocation5 + $0x40] sm:$0xff]
    %v111 = vld [vmem:[#allocation5 + $0x48] sm:$0xff]
    %v112 = vld [vmem:[#allocation5 + $0x50] sm:$0xff]
    %v113 = vld [vmem:[#allocation5 + $0x58] sm:$0xff]
    %v114 = vld [vmem:[#allocation5 + $0x60] sm:$0xff]
    %v115 = vld [vmem:[#allocation5 + $0x68] sm:$0xff]
    %v116 = vld [vmem:[#allocation5 + $0x70] sm:$0xff]
    %v117 = vld [vmem:[#allocation5 + $0x78] sm:$0xff]
    %v118 = vld [vmem:[#allocation5 + $0x80] sm:$0xff]
    %v119 = vld [vmem:[#allocation5 + $0x88] sm:$0xff]
    %v120 = vld [vmem:[#allocation5 + $0x90] sm:$0xff]
    %v121 = vld [vmem:[#allocation5 + $0x98] sm:$0xff]
    %v122 = vld [vmem:[#allocation5 + $0xa0] sm:$0xff]
    %v123 = vld [vmem:[#allocation5 + $0xa8] sm:$0xff]
    %v124 = vld [vmem:[#allocation5 + $0xb0] sm:$0xff]
    %v125 = vld [vmem:[#allocation5 + $0xb8] sm:$0xff]
    %v126 = vld [vmem:[#allocation5 + $0xc0] sm:$0xff]
    %v127 = vld [vmem:[#allocation5 + $0xc8] sm:$0xff]
    %v128 = vld [vmem:[#allocation5 + $0xd0] sm:$0xff]
    %v129 = vld [vmem:[#allocation5 + $0xd8] sm:$0xff]
    %v130 = vld [vmem:[#allocation5 + $0xe0] sm:$0xff]
    %v131 = vld [vmem:[#allocation5 + $0xe8] sm:$0xff]
    %v132 = vld [vmem:[#allocation5 + $0xf0] sm:$0xff]
    %v133 = vld [vmem:[#allocation5 + $0xf8] sm:$0xff]
    %v134 = vld [vmem:[#allocation5 + $0x100] sm:$0xff]
    %v135 = vld [vmem:[#allocation5 + $0x108] sm:$0xff]
    %v136 = vld [vmem:[#allocation5 + $0x110] sm:$0xff]
    %v137 = vld [vmem:[#allocation5 + $0x118] sm:$0xff]
    %v138 = vld [vmem:[#allocation5 + $0x120] sm:$0xff]
    %v139 = vld [vmem:[#allocation5 + $0x128] sm:$0xff]
    %v140 = vld [vmem:[#allocation5 + $0x130] sm:$0xff]
    %v141 = vld [vmem:[#allocation5 + $0x138] sm:$0xff]
    %v142 = vld [vmem:[#allocation5 + $0x140] sm:$0xff]
    %v143 = vld [vmem:[#allocation5 + $0x148] sm:$0xff]
    %v144 = vld [vmem:[#allocation5 + $0x150] sm:$0xff]
    %v145 = vld [vmem:[#allocation5 + $0x158] sm:$0xff]
    %v146 = vld [vmem:[#allocation5 + $0x160] sm:$0xff]
    %v147 = vld [vmem:[#allocation5 + $0x168] sm:$0xff]
    %v148 = vld [vmem:[#allocation5 + $0x170] sm:$0xff]
    %v149 = vld [vmem:[#allocation5 + $0x178] sm:$0xff]
    %v150 = vld [vmem:[#allocation5 + $0x180] sm:$0xff]
    %v151 = vld [vmem:[#allocation5 + $0x188] sm:$0xff]
    %v152 = vld [vmem:[#allocation5 + $0x190] sm:$0xff]
    %v153 = vld [vmem:[#allocation5 + $0x198] sm:$0xff]
    %v154 = vld [vmem:[#allocation5 + $0x1a0] sm:$0xff]
    %v155 = vld [vmem:[#allocation5 + $0x1a8] sm:$0xff]
    %v156 = vld [vmem:[#allocation5 + $0x1b0] sm:$0xff]
    %v157 = vld [vmem:[#allocation5 + $0x1b8] sm:$0xff]
    %v158 = vld [vmem:[#allocation5 + $0x1c0] sm:$0xff]
    %v159 = vld [vmem:[#allocation5 + $0x1c8] sm:$0xff]
    %v160 = vld [vmem:[#allocation5 + $0x1d0] sm:$0xff]
    %v161 = vld [vmem:[#allocation5 + $0x1d8] sm:$0xff]
    %v162 = vld [vmem:[#allocation5 + $0x1e0] sm:$0xff]
    %v163 = vld [vmem:[#allocation5 + $0x1e8] sm:$0xff]
    %v164 = vld [vmem:[#allocation5 + $0x1f0] sm:$0xff]
    %v165 = vld [vmem:[#allocation5 + $0x1f8] sm:$0xff]
    %v166 = vld [vmem:[#allocation5 + $0x200] sm:$0xff]
    %v167 = vld [vmem:[#allocation5 + $0x208] sm:$0xff]
    %v168 = vld [vmem:[#allocation5 + $0x210] sm:$0xff]
    %v169 = vld [vmem:[#allocation5 + $0x218] sm:$0xff]
    %v170 = vld [vmem:[#allocation5 + $0x220] sm:$0xff]
    %v171 = vld [vmem:[#allocation5 + $0x228] sm:$0xff]
    %v172 = vld [vmem:[#allocation5 + $0x230] sm:$0xff]
    %v173 = vld [vmem:[#allocation5 + $0x238] sm:$0xff]
    %v174 = vld [vmem:[#allocation5 + $0x240] sm:$0xff]
    %v175 = vld [vmem:[#allocation5 + $0x248] sm:$0xff]
    %v176 = vld [vmem:[#allocation5 + $0x250] sm:$0xff]
    %v177 = vld [vmem:[#allocation5 + $0x258] sm:$0xff]
    %v178 = vld [vmem:[#allocation5 + $0x260] sm:$0xff]
    %v179 = vld [vmem:[#allocation5 + $0x268] sm:$0xff]
    %v180 = vld [vmem:[#allocation5 + $0x270] sm:$0xff]
    %v181 = vld [vmem:[#allocation5 + $0x278] sm:$0xff]
    %v182 = vld [vmem:[#allocation5 + $0x280] sm:$0xff]
    %v183 = vld [vmem:[#allocation5 + $0x288] sm:$0xff]
    %v184 = vld [vmem:[#allocation5 + $0x290] sm:$0xff]
    %v185 = vld [vmem:[#allocation5 + $0x298] sm:$0xff]
    %v186 = vld [vmem:[#allocation5 + $0x2a0] sm:$0xff]
    %v187 = vld [vmem:[#allocation5 + $0x2a8] sm:$0xff]
    %v188 = vld [vmem:[#allocation5 + $0x2b0] sm:$0xff]
    %v189 = vld [vmem:[#allocation5 + $0x2b8] sm:$0xff]
    %v190 = vld [vmem:[#allocation5 + $0x2c0] sm:$0xff]
    %v191 = vld [vmem:[#allocation5 + $0x2c8] sm:$0xff]
    %v192 = vld [vmem:[#allocation5 + $0x2d0] sm:$0xff]
    %v193 = vld [vmem:[#allocation5 + $0x2d8] sm:$0xff]
    %v194 = vld [vmem:[#allocation5 + $0x2e0] sm:$0xff]
    %v195 = vld [vmem:[#allocation5 + $0x2e8] sm:$0xff]
    %v196 = vld [vmem:[#allocation5 + $0x2f0] sm:$0xff]
    %v197 = vld [vmem:[#allocation5 + $0x2f8] sm:$0xff]
    %v198 = vld [vmem:[#allocation5 + $0x300] sm:$0xff]
    %v199 = vld [vmem:[#allocation5 + $0x308] sm:$0xff]
    %v200 = vld [vmem:[#allocation5 + $0x310] sm:$0xff]
    %v201 = vld [vmem:[#allocation5 + $0x318] sm:$0xff]
    %v202 = vld [vmem:[#allocation5 + $0x320] sm:$0xff]
    %v203 = vld [vmem:[#allocation5 + $0x328] sm:$0xff]
    %v204 = vld [vmem:[#allocation5 + $0x330] sm:$0xff]
    %v205 = vld [vmem:[#allocation5 + $0x338] sm:$0xff]
    %v206 = vld [vmem:[#allocation5 + $0x340] sm:$0xff]
    %v207 = vld [vmem:[#allocation5 + $0x348] sm:$0xff]
    %v208 = vld [vmem:[#allocation5 + $0x350] sm:$0xff]
    %v209 = vld [vmem:[#allocation5 + $0x358] sm:$0xff]
    %v210 = vld [vmem:[#allocation5 + $0x360] sm:$0xff]
    %v211 = vld [vmem:[#allocation5 + $0x368] sm:$0xff]
    %v212 = vld [vmem:[#allocation5 + $0x370] sm:$0xff]
    %v213 = vld [vmem:[#allocation5 + $0x378] sm:$0xff]
    %v214 = vld [vmem:[#allocation5 + $0x380] sm:$0xff]
    %v215 = vld [vmem:[#allocation5 + $0x388] sm:$0xff]
    %v216 = vld [vmem:[#allocation5 + $0x390] sm:$0xff]
    %v217 = vld [vmem:[#allocation5 + $0x398] sm:$0xff]
    %v218 = vld [vmem:[#allocation5 + $0x3a0] sm:$0xff]
    %v219 = vld [vmem:[#allocation5 + $0x3a8] sm:$0xff]
    %v220 = vld [vmem:[#allocation5 + $0x3b0] sm:$0xff]
    %v221 = vld [vmem:[#allocation5 + $0x3b8] sm:$0xff]
    %v222 = vld [vmem:[#allocation5 + $0x3c0] sm:$0xff]
    %v223 = vld [vmem:[#allocation5 + $0x3c8] sm:$0xff]
    %v224 = vld [vmem:[#allocation5 + $0x3d0] sm:$0xff]
    %v225 = vld [vmem:[#allocation5 + $0x3d8] sm:$0xff]
    %v226 = vld [vmem:[#allocation5 + $0x3e0] sm:$0xff]
    %v227 = vld [vmem:[#allocation5 + $0x3e8] sm:$0xff]
    %v228 = vld [vmem:[#allocation5 + $0x3f0] sm:$0xff]
    %v229 = vld [vmem:[#allocation5 + $0x3f8] sm:$0xff]
    %v230 = vld [vmem:[%s2] sm:$0xf]
    %v232 = vlaneseq
    %v233 = vshrl.u32 %v232, 7
    %v234 = vsub.s32 0, %v233
    %v235 = vrot.slane %v230, %v234
    %v236 = vlaneseq
    %v237 = vshrl.u32 %v236, 7
    %v238 = vsub.s32 1, %v237
    %v239 = vrot.slane %v230, %v238
    %v240 = vlaneseq
    %v241 = vshrl.u32 %v240, 7
    %v242 = vsub.s32 2, %v241
    %v243 = vrot.slane %v230, %v242
    %v244 = vlaneseq
    %v245 = vshrl.u32 %v244, 7
    %v246 = vsub.s32 3, %v245
    %v247 = vrot.slane %v230, %v246
    %v254 = vunpack.c.l.b16 %v100
    %v255 = vunpack.c.h.b16 %v100
    %v256 = vunpack.c.l.b16 %v101
    %v257 = vunpack.c.h.b16 %v101
    %v258 = vpack.c.b16 %v254, %v254
    %v259 = vpack.c.b16 %v255, %v255
    %v260 = vpack.c.b16 %v256, %v256
    %v261 = vpack.c.b16 %v257, %v257
    %v394 = vunpack.c.l.b16 %v102
    %v395 = vunpack.c.h.b16 %v102
    %v396 = vunpack.c.l.b16 %v103
    %v397 = vunpack.c.h.b16 %v103
    %v398 = vunpack.c.l.b16 %v104
    %v399 = vunpack.c.h.b16 %v104
    %v400 = vunpack.c.l.b16 %v105
    %v401 = vunpack.c.h.b16 %v105
    %v402 = vunpack.c.l.b16 %v106
    %v403 = vunpack.c.h.b16 %v106
    %v404 = vunpack.c.l.b16 %v107
    %v405 = vunpack.c.h.b16 %v107
    %v406 = vunpack.c.l.b16 %v108
    %v407 = vunpack.c.h.b16 %v108
    %v408 = vunpack.c.l.b16 %v109
    %v409 = vunpack.c.h.b16 %v109
    %v410 = vunpack.c.l.b16 %v110
    %v411 = vunpack.c.h.b16 %v110
    %v412 = vunpack.c.l.b16 %v111
    %v413 = vunpack.c.h.b16 %v111
    %v414 = vunpack.c.l.b16 %v112
    %v415 = vunpack.c.h.b16 %v112
    %v416 = vunpack.c.l.b16 %v113
    %v417 = vunpack.c.h.b16 %v113
    %v418 = vunpack.c.l.b16 %v114
    %v419 = vunpack.c.h.b16 %v114
    %v420 = vunpack.c.l.b16 %v115
    %v421 = vunpack.c.h.b16 %v115
    %v422 = vunpack.c.l.b16 %v116
    %v423 = vunpack.c.h.b16 %v116
    %v424 = vunpack.c.l.b16 %v117
    %v425 = vunpack.c.h.b16 %v117
    %v426 = vunpack.c.l.b16 %v118
    %v427 = vunpack.c.h.b16 %v118
    %v428 = vunpack.c.l.b16 %v119
    %v429 = vunpack.c.h.b16 %v119
    %v430 = vunpack.c.l.b16 %v120
    %v431 = vunpack.c.h.b16 %v120
    %v432 = vunpack.c.l.b16 %v121
    %v433 = vunpack.c.h.b16 %v121
    %v434 = vunpack.c.l.b16 %v122
    %v435 = vunpack.c.h.b16 %v122
    %v436 = vunpack.c.l.b16 %v123
    %v437 = vunpack.c.h.b16 %v123
    %v438 = vunpack.c.l.b16 %v124
    %v439 = vunpack.c.h.b16 %v124
    %v440 = vunpack.c.l.b16 %v125
    %v441 = vunpack.c.h.b16 %v125
    %v442 = vunpack.c.l.b16 %v126
    %v443 = vunpack.c.h.b16 %v126
    %v444 = vunpack.c.l.b16 %v127
    %v445 = vunpack.c.h.b16 %v127
    %v446 = vunpack.c.l.b16 %v128
    %v447 = vunpack.c.h.b16 %v128
    %v448 = vunpack.c.l.b16 %v129
    %v449 = vunpack.c.h.b16 %v129
    %v450 = vunpack.c.l.b16 %v130
    %v451 = vunpack.c.h.b16 %v130
    %v452 = vunpack.c.l.b16 %v131
    %v453 = vunpack.c.h.b16 %v131
    %v454 = vunpack.c.l.b16 %v132
    %v455 = vunpack.c.h.b16 %v132
    %v456 = vunpack.c.l.b16 %v133
    %v457 = vunpack.c.h.b16 %v133
    %v458 = vunpack.c.l.b16 %v134
    %v459 = vunpack.c.h.b16 %v134
    %v460 = vunpack.c.l.b16 %v135
    %v461 = vunpack.c.h.b16 %v135
    %v462 = vunpack.c.l.b16 %v136
    %v463 = vunpack.c.h.b16 %v136
    %v464 = vunpack.c.l.b16 %v137
    %v465 = vunpack.c.h.b16 %v137
    %v466 = vunpack.c.l.b16 %v138
    %v467 = vunpack.c.h.b16 %v138
    %v468 = vunpack.c.l.b16 %v139
    %v469 = vunpack.c.h.b16 %v139
    %v470 = vunpack.c.l.b16 %v140
    %v471 = vunpack.c.h.b16 %v140
    %v472 = vunpack.c.l.b16 %v141
    %v473 = vunpack.c.h.b16 %v141
    %v474 = vunpack.c.l.b16 %v142
    %v475 = vunpack.c.h.b16 %v142
    %v476 = vunpack.c.l.b16 %v143
    %v477 = vunpack.c.h.b16 %v143
    %v478 = vunpack.c.l.b16 %v144
    %v479 = vunpack.c.h.b16 %v144
    %v480 = vunpack.c.l.b16 %v145
    %v481 = vunpack.c.h.b16 %v145
    %v482 = vunpack.c.l.b16 %v146
    %v483 = vunpack.c.h.b16 %v146
    %v484 = vunpack.c.l.b16 %v147
    %v485 = vunpack.c.h.b16 %v147
    %v486 = vunpack.c.l.b16 %v148
    %v487 = vunpack.c.h.b16 %v148
    %v488 = vunpack.c.l.b16 %v149
    %v489 = vunpack.c.h.b16 %v149
    %v490 = vunpack.c.l.b16 %v150
    %v491 = vunpack.c.h.b16 %v150
    %v492 = vunpack.c.l.b16 %v151
    %v493 = vunpack.c.h.b16 %v151
    %v494 = vunpack.c.l.b16 %v152
    %v495 = vunpack.c.h.b16 %v152
    %v496 = vunpack.c.l.b16 %v153
    %v497 = vunpack.c.h.b16 %v153
    %v498 = vunpack.c.l.b16 %v154
    %v499 = vunpack.c.h.b16 %v154
    %v500 = vunpack.c.l.b16 %v155
    %v501 = vunpack.c.h.b16 %v155
    %v502 = vunpack.c.l.b16 %v156
    %v503 = vunpack.c.h.b16 %v156
    %v504 = vunpack.c.l.b16 %v157
    %v505 = vunpack.c.h.b16 %v157
    %v506 = vunpack.c.l.b16 %v158
    %v507 = vunpack.c.h.b16 %v158
    %v508 = vunpack.c.l.b16 %v159
    %v509 = vunpack.c.h.b16 %v159
    %v510 = vunpack.c.l.b16 %v160
    %v511 = vunpack.c.h.b16 %v160
    %v512 = vunpack.c.l.b16 %v161
    %v513 = vunpack.c.h.b16 %v161
    %v514 = vunpack.c.l.b16 %v162
    %v515 = vunpack.c.h.b16 %v162
    %v516 = vunpack.c.l.b16 %v163
    %v517 = vunpack.c.h.b16 %v163
    %v518 = vunpack.c.l.b16 %v164
    %v519 = vunpack.c.h.b16 %v164
    %v520 = vunpack.c.l.b16 %v165
    %v521 = vunpack.c.h.b16 %v165
    %v522 = vunpack.c.l.b16 %v166
    %v523 = vunpack.c.h.b16 %v166
    %v524 = vunpack.c.l.b16 %v167
    %v525 = vunpack.c.h.b16 %v167
    %v526 = vunpack.c.l.b16 %v168
    %v527 = vunpack.c.h.b16 %v168
    %v528 = vunpack.c.l.b16 %v169
    %v529 = vunpack.c.h.b16 %v169
    %v530 = vunpack.c.l.b16 %v170
    %v531 = vunpack.c.h.b16 %v170
    %v532 = vunpack.c.l.b16 %v171
    %v533 = vunpack.c.h.b16 %v171
    %v534 = vunpack.c.l.b16 %v172
    %v535 = vunpack.c.h.b16 %v172
    %v536 = vunpack.c.l.b16 %v173
    %v537 = vunpack.c.h.b16 %v173
    %v538 = vunpack.c.l.b16 %v174
    %v539 = vunpack.c.h.b16 %v174
    %v540 = vunpack.c.l.b16 %v175
    %v541 = vunpack.c.h.b16 %v175
    %v542 = vunpack.c.l.b16 %v176
    %v543 = vunpack.c.h.b16 %v176
    %v544 = vunpack.c.l.b16 %v177
    %v545 = vunpack.c.h.b16 %v177
    %v546 = vunpack.c.l.b16 %v178
    %v547 = vunpack.c.h.b16 %v178
    %v548 = vunpack.c.l.b16 %v179
    %v549 = vunpack.c.h.b16 %v179
    %v550 = vunpack.c.l.b16 %v180
    %v551 = vunpack.c.h.b16 %v180
    %v552 = vunpack.c.l.b16 %v181
    %v553 = vunpack.c.h.b16 %v181
    %v554 = vunpack.c.l.b16 %v182
    %v555 = vunpack.c.h.b16 %v182
    %v556 = vunpack.c.l.b16 %v183
    %v557 = vunpack.c.h.b16 %v183
    %v558 = vunpack.c.l.b16 %v184
    %v559 = vunpack.c.h.b16 %v184
    %v560 = vunpack.c.l.b16 %v185
    %v561 = vunpack.c.h.b16 %v185
    %v562 = vunpack.c.l.b16 %v186
    %v563 = vunpack.c.h.b16 %v186
    %v564 = vunpack.c.l.b16 %v187
    %v565 = vunpack.c.h.b16 %v187
    %v566 = vunpack.c.l.b16 %v188
    %v567 = vunpack.c.h.b16 %v188
    %v568 = vunpack.c.l.b16 %v189
    %v569 = vunpack.c.h.b16 %v189
    %v570 = vunpack.c.l.b16 %v190
    %v571 = vunpack.c.h.b16 %v190
    %v572 = vunpack.c.l.b16 %v191
    %v573 = vunpack.c.h.b16 %v191
    %v574 = vunpack.c.l.b16 %v192
    %v575 = vunpack.c.h.b16 %v192
    %v576 = vunpack.c.l.b16 %v193
    %v577 = vunpack.c.h.b16 %v193
    %v578 = vunpack.c.l.b16 %v194
    %v579 = vunpack.c.h.b16 %v194
    %v580 = vunpack.c.l.b16 %v195
    %v581 = vunpack.c.h.b16 %v195
    %v582 = vunpack.c.l.b16 %v196
    %v583 = vunpack.c.h.b16 %v196
    %v584 = vunpack.c.l.b16 %v197
    %v585 = vunpack.c.h.b16 %v197
    %v586 = vunpack.c.l.b16 %v198
    %v587 = vunpack.c.h.b16 %v198
    %v588 = vunpack.c.l.b16 %v199
    %v589 = vunpack.c.h.b16 %v199
    %v590 = vunpack.c.l.b16 %v200
    %v591 = vunpack.c.h.b16 %v200
    %v592 = vunpack.c.l.b16 %v201
    %v593 = vunpack.c.h.b16 %v201
    %v594 = vunpack.c.l.b16 %v202
    %v595 = vunpack.c.h.b16 %v202
    %v596 = vunpack.c.l.b16 %v203
    %v597 = vunpack.c.h.b16 %v203
    %v598 = vunpack.c.l.b16 %v204
    %v599 = vunpack.c.h.b16 %v204
    %v600 = vunpack.c.l.b16 %v205
    %v601 = vunpack.c.h.b16 %v205
    %v602 = vunpack.c.l.b16 %v206
    %v603 = vunpack.c.h.b16 %v206
    %v604 = vunpack.c.l.b16 %v207
    %v605 = vunpack.c.h.b16 %v207
    %v606 = vunpack.c.l.b16 %v208
    %v607 = vunpack.c.h.b16 %v208
    %v608 = vunpack.c.l.b16 %v209
    %v609 = vunpack.c.h.b16 %v209
    %v610 = vunpack.c.l.b16 %v210
    %v611 = vunpack.c.h.b16 %v210
    %v612 = vunpack.c.l.b16 %v211
    %v613 = vunpack.c.h.b16 %v211
    %v614 = vunpack.c.l.b16 %v212
    %v615 = vunpack.c.h.b16 %v212
    %v616 = vunpack.c.l.b16 %v213
    %v617 = vunpack.c.h.b16 %v213
    %v618 = vunpack.c.l.b16 %v214
    %v619 = vunpack.c.h.b16 %v214
    %v620 = vunpack.c.l.b16 %v215
    %v621 = vunpack.c.h.b16 %v215
    %v622 = vunpack.c.l.b16 %v216
    %v623 = vunpack.c.h.b16 %v216
    %v624 = vunpack.c.l.b16 %v217
    %v625 = vunpack.c.h.b16 %v217
    %v626 = vunpack.c.l.b16 %v218
    %v627 = vunpack.c.h.b16 %v218
    %v628 = vunpack.c.l.b16 %v219
    %v629 = vunpack.c.h.b16 %v219
    %v630 = vunpack.c.l.b16 %v220
    %v631 = vunpack.c.h.b16 %v220
    %v632 = vunpack.c.l.b16 %v221
    %v633 = vunpack.c.h.b16 %v221
    %v634 = vunpack.c.l.b16 %v222
    %v635 = vunpack.c.h.b16 %v222
    %v636 = vunpack.c.l.b16 %v223
    %v637 = vunpack.c.h.b16 %v223
    %v638 = vunpack.c.l.b16 %v224
    %v639 = vunpack.c.h.b16 %v224
    %v640 = vunpack.c.l.b16 %v225
    %v641 = vunpack.c.h.b16 %v225
    %v642 = vunpack.c.l.b16 %v226
    %v643 = vunpack.c.h.b16 %v226
    %v644 = vunpack.c.l.b16 %v227
    %v645 = vunpack.c.h.b16 %v227
    %v646 = vunpack.c.l.b16 %v228
    %v647 = vunpack.c.h.b16 %v228
    %v648 = vunpack.c.l.b16 %v229
    %v649 = vunpack.c.h.b16 %v229
    %v650 = vpack.c.b16 %v398, %v394
    %v651 = vpack.c.b16 %v399, %v395
    %v652 = vpack.c.b16 %v400, %v396
    %v653 = vpack.c.b16 %v401, %v397
    %v654 = vpack.c.b16 %v406, %v402
    %v655 = vpack.c.b16 %v407, %v403
    %v656 = vpack.c.b16 %v408, %v404
    %v657 = vpack.c.b16 %v409, %v405
    %v658 = vpack.c.b16 %v414, %v410
    %v659 = vpack.c.b16 %v415, %v411
    %v660 = vpack.c.b16 %v416, %v412
    %v661 = vpack.c.b16 %v417, %v413
    %v662 = vpack.c.b16 %v422, %v418
    %v663 = vpack.c.b16 %v423, %v419
    %v664 = vpack.c.b16 %v424, %v420
    %v665 = vpack.c.b16 %v425, %v421
    %v666 = vpack.c.b16 %v430, %v426
    %v667 = vpack.c.b16 %v431, %v427
    %v668 = vpack.c.b16 %v432, %v428
    %v669 = vpack.c.b16 %v433, %v429
    %v670 = vpack.c.b16 %v438, %v434
    %v671 = vpack.c.b16 %v439, %v435
    %v672 = vpack.c.b16 %v440, %v436
    %v673 = vpack.c.b16 %v441, %v437
    %v674 = vpack.c.b16 %v446, %v442
    %v675 = vpack.c.b16 %v447, %v443
    %v676 = vpack.c.b16 %v448, %v444
    %v677 = vpack.c.b16 %v449, %v445
    %v678 = vpack.c.b16 %v454, %v450
    %v679 = vpack.c.b16 %v455, %v451
    %v680 = vpack.c.b16 %v456, %v452
    %v681 = vpack.c.b16 %v457, %v453
    %v682 = vpack.c.b16 %v462, %v458
    %v683 = vpack.c.b16 %v463, %v459
    %v684 = vpack.c.b16 %v464, %v460
    %v685 = vpack.c.b16 %v465, %v461
    %v686 = vpack.c.b16 %v470, %v466
    %v687 = vpack.c.b16 %v471, %v467
    %v688 = vpack.c.b16 %v472, %v468
    %v689 = vpack.c.b16 %v473, %v469
    %v690 = vpack.c.b16 %v478, %v474
    %v691 = vpack.c.b16 %v479, %v475
    %v692 = vpack.c.b16 %v480, %v476
    %v693 = vpack.c.b16 %v481, %v477
    %v694 = vpack.c.b16 %v486, %v482
    %v695 = vpack.c.b16 %v487, %v483
    %v696 = vpack.c.b16 %v488, %v484
    %v697 = vpack.c.b16 %v489, %v485
    %v698 = vpack.c.b16 %v494, %v490
    %v699 = vpack.c.b16 %v495, %v491
    %v700 = vpack.c.b16 %v496, %v492
    %v701 = vpack.c.b16 %v497, %v493
    %v702 = vpack.c.b16 %v502, %v498
    %v703 = vpack.c.b16 %v503, %v499
    %v704 = vpack.c.b16 %v504, %v500
    %v705 = vpack.c.b16 %v505, %v501
    %v706 = vpack.c.b16 %v510, %v506
    %v707 = vpack.c.b16 %v511, %v507
    %v708 = vpack.c.b16 %v512, %v508
    %v709 = vpack.c.b16 %v513, %v509
    %v710 = vpack.c.b16 %v518, %v514
    %v711 = vpack.c.b16 %v519, %v515
    %v712 = vpack.c.b16 %v520, %v516
    %v713 = vpack.c.b16 %v521, %v517
    %v714 = vpack.c.b16 %v526, %v522
    %v715 = vpack.c.b16 %v527, %v523
    %v716 = vpack.c.b16 %v528, %v524
    %v717 = vpack.c.b16 %v529, %v525
    %v718 = vpack.c.b16 %v534, %v530
    %v719 = vpack.c.b16 %v535, %v531
    %v720 = vpack.c.b16 %v536, %v532
    %v721 = vpack.c.b16 %v537, %v533
    %v722 = vpack.c.b16 %v542, %v538
    %v723 = vpack.c.b16 %v543, %v539
    %v724 = vpack.c.b16 %v544, %v540
    %v725 = vpack.c.b16 %v545, %v541
    %v726 = vpack.c.b16 %v550, %v546
    %v727 = vpack.c.b16 %v551, %v547
    %v728 = vpack.c.b16 %v552, %v548
    %v729 = vpack.c.b16 %v553, %v549
    %v730 = vpack.c.b16 %v558, %v554
    %v731 = vpack.c.b16 %v559, %v555
    %v732 = vpack.c.b16 %v560, %v556
    %v733 = vpack.c.b16 %v561, %v557
    %v734 = vpack.c.b16 %v566, %v562
    %v735 = vpack.c.b16 %v567, %v563
    %v736 = vpack.c.b16 %v568, %v564
    %v737 = vpack.c.b16 %v569, %v565
    %v738 = vpack.c.b16 %v574, %v570
    %v739 = vpack.c.b16 %v575, %v571
    %v740 = vpack.c.b16 %v576, %v572
    %v741 = vpack.c.b16 %v577, %v573
    %v742 = vpack.c.b16 %v582, %v578
    %v743 = vpack.c.b16 %v583, %v579
    %v744 = vpack.c.b16 %v584, %v580
    %v745 = vpack.c.b16 %v585, %v581
    %v746 = vpack.c.b16 %v590, %v586
    %v747 = vpack.c.b16 %v591, %v587
    %v748 = vpack.c.b16 %v592, %v588
    %v749 = vpack.c.b16 %v593, %v589
    %v750 = vpack.c.b16 %v598, %v594
    %v751 = vpack.c.b16 %v599, %v595
    %v752 = vpack.c.b16 %v600, %v596
    %v753 = vpack.c.b16 %v601, %v597
    %v754 = vpack.c.b16 %v606, %v602
    %v755 = vpack.c.b16 %v607, %v603
    %v756 = vpack.c.b16 %v608, %v604
    %v757 = vpack.c.b16 %v609, %v605
    %v758 = vpack.c.b16 %v614, %v610
    %v759 = vpack.c.b16 %v615, %v611
    %v760 = vpack.c.b16 %v616, %v612
    %v761 = vpack.c.b16 %v617, %v613
    %v762 = vpack.c.b16 %v622, %v618
    %v763 = vpack.c.b16 %v623, %v619
    %v764 = vpack.c.b16 %v624, %v620
    %v765 = vpack.c.b16 %v625, %v621
    %v766 = vpack.c.b16 %v630, %v626
    %v767 = vpack.c.b16 %v631, %v627
    %v768 = vpack.c.b16 %v632, %v628
    %v769 = vpack.c.b16 %v633, %v629
    %v770 = vpack.c.b16 %v638, %v634
    %v771 = vpack.c.b16 %v639, %v635
    %v772 = vpack.c.b16 %v640, %v636
    %v773 = vpack.c.b16 %v641, %v637
    %v774 = vpack.c.b16 %v646, %v642
    %v775 = vpack.c.b16 %v647, %v643
    %v776 = vpack.c.b16 %v648, %v644
    %v777 = vpack.c.b16 %v649, %v645
    %906 = vmatprep.subr.bf16.mxu0 %v651
    %907 = vmatpush1.bf16.msra.mxu0 %v650
    %908 = vmatprep.subr.bf16.mxu0 %v655
    %909 = vmatpush1.bf16.msra.mxu0 %v654
    %910 = vmatprep.subr.bf16.mxu0 %v659
    %911 = vmatpush1.bf16.msra.mxu0 %v658
    %912 = vmatprep.subr.bf16.mxu0 %v663
    %913 = vmatpush1.bf16.msra.mxu0 %v662
    %914 = vmatprep.subr.bf16.mxu0 %v667
    %915 = vmatpush1.bf16.msra.mxu0 %v666
    %916 = vmatprep.subr.bf16.mxu0 %v671
    %917 = vmatpush1.bf16.msra.mxu0 %v670
    %918 = vmatprep.subr.bf16.mxu0 %v675
    %919 = vmatpush1.bf16.msra.mxu0 %v674
    %920 = vmatprep.subr.bf16.mxu0 %v679
    %921 = vmatpush1.bf16.msra.mxu0 %v678
    %922 = vmatprep.subr.bf16.mxu0 %v683
    %923 = vmatpush1.bf16.msra.mxu0 %v682
    %924 = vmatprep.subr.bf16.mxu0 %v687
    %925 = vmatpush1.bf16.msra.mxu0 %v686
    %926 = vmatprep.subr.bf16.mxu0 %v691
    %927 = vmatpush1.bf16.msra.mxu0 %v690
    %928 = vmatprep.subr.bf16.mxu0 %v695
    %929 = vmatpush1.bf16.msra.mxu0 %v694
    %930 = vmatprep.subr.bf16.mxu0 %v699
    %931 = vmatpush1.bf16.msra.mxu0 %v698
    %932 = vmatprep.subr.bf16.mxu0 %v703
    %933 = vmatpush1.bf16.msra.mxu0 %v702
    %934 = vmatprep.subr.bf16.mxu0 %v707
    %935 = vmatpush1.bf16.msra.mxu0 %v706
    %936 = vmatprep.subr.bf16.mxu0 %v711
    %937 = vmatpush1.bf16.msra.mxu0 %v710
    %938 = vmatprep.mubr.bf16.mxu0 %v259
    %939 = vmatmul.mubr.bf16.gmra.mrb[0].mxu0 %v258
    %v940 = vpop.f32.mrb[0].mxu0
    %v941 = vadd.f32 %v235, %v940
    %v942 = vpop.f32.mrb[0].mxu0
    %v943 = vadd.f32 %v239, %v942
    %v944 = vpop.f32.mrb[0].mxu0
    %v945 = vpop.f32.mrb[0].mxu0
    %946 = vdwg.mxu0
    %947 = vmatprep.subr.bf16.mxu0 %v715
    %948 = vmatpush1.bf16.msra.mxu0 %v714
    %949 = vmatprep.subr.bf16.mxu0 %v719
    %950 = vmatpush1.bf16.msra.mxu0 %v718
    %951 = vmatprep.subr.bf16.mxu0 %v723
    %952 = vmatpush1.bf16.msra.mxu0 %v722
    %953 = vmatprep.subr.bf16.mxu0 %v727
    %954 = vmatpush1.bf16.msra.mxu0 %v726
    %955 = vmatprep.subr.bf16.mxu0 %v731
    %956 = vmatpush1.bf16.msra.mxu0 %v730
    %957 = vmatprep.subr.bf16.mxu0 %v735
    %958 = vmatpush1.bf16.msra.mxu0 %v734
    %959 = vmatprep.subr.bf16.mxu0 %v739
    %960 = vmatpush1.bf16.msra.mxu0 %v738
    %961 = vmatprep.subr.bf16.mxu0 %v743
    %962 = vmatpush1.bf16.msra.mxu0 %v742
    %963 = vmatprep.subr.bf16.mxu0 %v747
    %964 = vmatpush1.bf16.msra.mxu0 %v746
    %965 = vmatprep.subr.bf16.mxu0 %v751
    %966 = vmatpush1.bf16.msra.mxu0 %v750
    %967 = vmatprep.subr.bf16.mxu0 %v755
    %968 = vmatpush1.bf16.msra.mxu0 %v754
    %969 = vmatprep.subr.bf16.mxu0 %v759
    %970 = vmatpush1.bf16.msra.mxu0 %v758
    %971 = vmatprep.subr.bf16.mxu0 %v763
    %972 = vmatpush1.bf16.msra.mxu0 %v762
    %973 = vmatprep.subr.bf16.mxu0 %v767
    %974 = vmatpush1.bf16.msra.mxu0 %v766
    %975 = vmatprep.subr.bf16.mxu0 %v771
    %976 = vmatpush1.bf16.msra.mxu0 %v770
    %977 = vmatprep.subr.bf16.mxu0 %v775
    %978 = vmatpush1.bf16.msra.mxu0 %v774
    %979 = vmatprep.mubr.bf16.mxu0 %v261
    %980 = vmatmul.mubr.bf16.gmra.mrb[0].mxu0 %v260
    %v981 = vpop.f32.mrb[0].mxu0
    %v982 = vadd.f32 %v941, %v981
    %v983 = vpop.f32.mrb[0].mxu0
    %v984 = vadd.f32 %v943, %v983
    %v985 = vpop.f32.mrb[0].mxu0
    %v986 = vpop.f32.mrb[0].mxu0
    %987 = vdwg.mxu0
    %988 = vmatprep.subr.bf16.mxu0 %v653
    %989 = vmatpush1.bf16.msra.mxu0 %v652
    %990 = vmatprep.subr.bf16.mxu0 %v657
    %991 = vmatpush1.bf16.msra.mxu0 %v656
    %992 = vmatprep.subr.bf16.mxu0 %v661
    %993 = vmatpush1.bf16.msra.mxu0 %v660
    %994 = vmatprep.subr.bf16.mxu0 %v665
    %995 = vmatpush1.bf16.msra.mxu0 %v664
    %996 = vmatprep.subr.bf16.mxu0 %v669
    %997 = vmatpush1.bf16.msra.mxu0 %v668
    %998 = vmatprep.subr.bf16.mxu0 %v673
    %999 = vmatpush1.bf16.msra.mxu0 %v672
    %1000 = vmatprep.subr.bf16.mxu0 %v677
    %1001 = vmatpush1.bf16.msra.mxu0 %v676
    %1002 = vmatprep.subr.bf16.mxu0 %v681
    %1003 = vmatpush1.bf16.msra.mxu0 %v680
    %1004 = vmatprep.subr.bf16.mxu0 %v685
    %1005 = vmatpush1.bf16.msra.mxu0 %v684
    %1006 = vmatprep.subr.bf16.mxu0 %v689
    %1007 = vmatpush1.bf16.msra.mxu0 %v688
    %1008 = vmatprep.subr.bf16.mxu0 %v693
    %1009 = vmatpush1.bf16.msra.mxu0 %v692
    %1010 = vmatprep.subr.bf16.mxu0 %v697
    %1011 = vmatpush1.bf16.msra.mxu0 %v696
    %1012 = vmatprep.subr.bf16.mxu0 %v701
    %1013 = vmatpush1.bf16.msra.mxu0 %v700
    %1014 = vmatprep.subr.bf16.mxu0 %v705
    %1015 = vmatpush1.bf16.msra.mxu0 %v704
    %1016 = vmatprep.subr.bf16.mxu0 %v709
    %1017 = vmatpush1.bf16.msra.mxu0 %v708
    %1018 = vmatprep.subr.bf16.mxu0 %v713
    %1019 = vmatpush1.bf16.msra.mxu0 %v712
    %1020 = vmatprep.mubr.bf16.mxu0 %v259
    %1021 = vmatmul.mubr.bf16.gmra.mrb[0].mxu0 %v258
    %v1022 = vpop.f32.mrb[0].mxu0
    %v1023 = vadd.f32 %v243, %v1022
    %v1024 = vpop.f32.mrb[0].mxu0
    %v1025 = vadd.f32 %v247, %v1024
    %v1026 = vpop.f32.mrb[0].mxu0
    %v1027 = vpop.f32.mrb[0].mxu0
    %1028 = vdwg.mxu0
    %1029 = vmatprep.subr.bf16.mxu0 %v717
    %1030 = vmatpush1.bf16.msra.mxu0 %v716
    %1031 = vmatprep.subr.bf16.mxu0 %v721
    %1032 = vmatpush1.bf16.msra.mxu0 %v720
    %1033 = vmatprep.subr.bf16.mxu0 %v725
    %1034 = vmatpush1.bf16.msra.mxu0 %v724
    %1035 = vmatprep.subr.bf16.mxu0 %v729
    %1036 = vmatpush1.bf16.msra.mxu0 %v728
    %1037 = vmatprep.subr.bf16.mxu0 %v733
    %1038 = vmatpush1.bf16.msra.mxu0 %v732
    %1039 = vmatprep.subr.bf16.mxu0 %v737
    %1040 = vmatpush1.bf16.msra.mxu0 %v736
    %1041 = vmatprep.subr.bf16.mxu0 %v741
    %1042 = vmatpush1.bf16.msra.mxu0 %v740
    %1043 = vmatprep.subr.bf16.mxu0 %v745
    %1044 = vmatpush1.bf16.msra.mxu0 %v744
    %1045 = vmatprep.subr.bf16.mxu0 %v749
    %1046 = vmatpush1.bf16.msra.mxu0 %v748
    %1047 = vmatprep.subr.bf16.mxu0 %v753
    %1048 = vmatpush1.bf16.msra.mxu0 %v752
    %1049 = vmatprep.subr.bf16.mxu0 %v757
    %1050 = vmatpush1.bf16.msra.mxu0 %v756
    %1051 = vmatprep.subr.bf16.mxu0 %v761
    %1052 = vmatpush1.bf16.msra.mxu0 %v760
    %1053 = vmatprep.subr.bf16.mxu0 %v765
    %1054 = vmatpush1.bf16.msra.mxu0 %v764
    %1055 = vmatprep.subr.bf16.mxu0 %v769
    %1056 = vmatpush1.bf16.msra.mxu0 %v768
    %1057 = vmatprep.subr.bf16.mxu0 %v773
    %1058 = vmatpush1.bf16.msra.mxu0 %v772
    %1059 = vmatprep.subr.bf16.mxu0 %v777
    %1060 = vmatpush1.bf16.msra.mxu0 %v776
    %1061 = vmatprep.mubr.bf16.mxu0 %v261
    %1062 = vmatmul.mubr.bf16.gmra.mrb[0].mxu0 %v260
    %v1063 = vpop.f32.mrb[0].mxu0
    %v1064 = vadd.f32 %v1023, %v1063
    %v1065 = vpop.f32.mrb[0].mxu0
    %v1066 = vadd.f32 %v1025, %v1065
    %v1067 = vpop.f32.mrb[0].mxu0
    %v1068 = vpop.f32.mrb[0].mxu0
    %1069 = vdwg.mxu0
    %v1070 = vmax.f32 %v982, 0.0
    %v1071 = vmax.f32 %v984, 0.0
    %v1072 = vmax.f32 %v1064, 0.0
    %v1073 = vmax.f32 %v1066, 0.0
    %v1074 = vpack.c.bf16 %v1070, %v1070
    %v1075 = vpack.c.bf16 %v1071, %v1071
    %v1076 = vpack.c.bf16 %v1072, %v1072
    %v1077 = vpack.c.bf16 %v1073, %v1073
    %v1078 = vld [vmem:[#allocation7] sm:$0xff]
    %v1079 = vld [vmem:[#allocation7 + $0x8] sm:$0xff]
    %v1080 = vld [vmem:[#allocation7 + $0x10] sm:$0xff]
    %v1081 = vld [vmem:[#allocation7 + $0x18] sm:$0xff]
    %v1082 = vld [vmem:[#allocation7 + $0x20] sm:$0xff]
    %v1083 = vld [vmem:[#allocation7 + $0x28] sm:$0xff]
    %v1084 = vld [vmem:[#allocation7 + $0x30] sm:$0xff]
    %v1085 = vld [vmem:[#allocation7 + $0x38] sm:$0xff]
    %v1086 = vld [vmem:[#allocation7 + $0x40] sm:$0xff]
    %v1087 = vld [vmem:[#allocation7 + $0x48] sm:$0xff]
    %v1088 = vld [vmem:[#allocation7 + $0x50] sm:$0xff]
    %v1089 = vld [vmem:[#allocation7 + $0x58] sm:$0xff]
    %v1090 = vld [vmem:[#allocation7 + $0x60] sm:$0xff]
    %v1091 = vld [vmem:[#allocation7 + $0x68] sm:$0xff]
    %v1092 = vld [vmem:[#allocation7 + $0x70] sm:$0xff]
    %v1093 = vld [vmem:[#allocation7 + $0x78] sm:$0xff]
    %v1094 = vld [vmem:[#allocation7 + $0x80] sm:$0xff]
    %v1095 = vld [vmem:[#allocation7 + $0x88] sm:$0xff]
    %v1096 = vld [vmem:[#allocation7 + $0x90] sm:$0xff]
    %v1097 = vld [vmem:[#allocation7 + $0x98] sm:$0xff]
    %v1098 = vld [vmem:[#allocation7 + $0xa0] sm:$0xff]
    %v1099 = vld [vmem:[#allocation7 + $0xa8] sm:$0xff]
    %v1100 = vld [vmem:[#allocation7 + $0xb0] sm:$0xff]
    %v1101 = vld [vmem:[#allocation7 + $0xb8] sm:$0xff]
    %v1102 = vld [vmem:[#allocation7 + $0xc0] sm:$0xff]
    %v1103 = vld [vmem:[#allocation7 + $0xc8] sm:$0xff]
    %v1104 = vld [vmem:[#allocation7 + $0xd0] sm:$0xff]
    %v1105 = vld [vmem:[#allocation7 + $0xd8] sm:$0xff]
    %v1106 = vld [vmem:[#allocation7 + $0xe0] sm:$0xff]
    %v1107 = vld [vmem:[#allocation7 + $0xe8] sm:$0xff]
    %v1108 = vld [vmem:[#allocation7 + $0xf0] sm:$0xff]
    %v1109 = vld [vmem:[#allocation7 + $0xf8] sm:$0xff]
    %v1110 = vld [vmem:[#allocation7 + $0x100] sm:$0xff]
    %v1111 = vld [vmem:[#allocation7 + $0x108] sm:$0xff]
    %v1112 = vld [vmem:[#allocation7 + $0x110] sm:$0xff]
    %v1113 = vld [vmem:[#allocation7 + $0x118] sm:$0xff]
    %v1114 = vld [vmem:[#allocation7 + $0x120] sm:$0xff]
    %v1115 = vld [vmem:[#allocation7 + $0x128] sm:$0xff]
    %v1116 = vld [vmem:[#allocation7 + $0x130] sm:$0xff]
    %v1117 = vld [vmem:[#allocation7 + $0x138] sm:$0xff]
    %v1118 = vld [vmem:[#allocation7 + $0x140] sm:$0xff]
    %v1119 = vld [vmem:[#allocation7 + $0x148] sm:$0xff]
    %v1120 = vld [vmem:[#allocation7 + $0x150] sm:$0xff]
    %v1121 = vld [vmem:[#allocation7 + $0x158] sm:$0xff]
    %v1122 = vld [vmem:[#allocation7 + $0x160] sm:$0xff]
    %v1123 = vld [vmem:[#allocation7 + $0x168] sm:$0xff]
    %v1124 = vld [vmem:[#allocation7 + $0x170] sm:$0xff]
    %v1125 = vld [vmem:[#allocation7 + $0x178] sm:$0xff]
    %v1126 = vld [vmem:[#allocation7 + $0x180] sm:$0xff]
    %v1127 = vld [vmem:[#allocation7 + $0x188] sm:$0xff]
    %v1128 = vld [vmem:[#allocation7 + $0x190] sm:$0xff]
    %v1129 = vld [vmem:[#allocation7 + $0x198] sm:$0xff]
    %v1130 = vld [vmem:[#allocation7 + $0x1a0] sm:$0xff]
    %v1131 = vld [vmem:[#allocation7 + $0x1a8] sm:$0xff]
    %v1132 = vld [vmem:[#allocation7 + $0x1b0] sm:$0xff]
    %v1133 = vld [vmem:[#allocation7 + $0x1b8] sm:$0xff]
    %v1134 = vld [vmem:[#allocation7 + $0x1c0] sm:$0xff]
    %v1135 = vld [vmem:[#allocation7 + $0x1c8] sm:$0xff]
    %v1136 = vld [vmem:[#allocation7 + $0x1d0] sm:$0xff]
    %v1137 = vld [vmem:[#allocation7 + $0x1d8] sm:$0xff]
    %v1138 = vld [vmem:[#allocation7 + $0x1e0] sm:$0xff]
    %v1139 = vld [vmem:[#allocation7 + $0x1e8] sm:$0xff]
    %v1140 = vld [vmem:[#allocation7 + $0x1f0] sm:$0xff]
    %v1141 = vld [vmem:[#allocation7 + $0x1f8] sm:$0xff]
    %v1142 = vld [vmem:[%s4] sm:$0x3]
    %v1144 = vlaneseq
    %v1145 = vshrl.u32 %v1144, 7
    %v1146 = vsub.s32 0, %v1145
    %v1147 = vrot.slane %v1142, %v1146
    %v1148 = vlaneseq
    %v1149 = vshrl.u32 %v1148, 7
    %v1150 = vsub.s32 1, %v1149
    %v1151 = vrot.slane %v1142, %v1150
    %v1218 = vunpack.c.l.b16 %v1078
    %v1219 = vunpack.c.h.b16 %v1078
    %v1220 = vunpack.c.l.b16 %v1079
    %v1221 = vunpack.c.h.b16 %v1079
    %v1222 = vunpack.c.l.b16 %v1080
    %v1223 = vunpack.c.h.b16 %v1080
    %v1224 = vunpack.c.l.b16 %v1081
    %v1225 = vunpack.c.h.b16 %v1081
    %v1226 = vunpack.c.l.b16 %v1082
    %v1227 = vunpack.c.h.b16 %v1082
    %v1228 = vunpack.c.l.b16 %v1083
    %v1229 = vunpack.c.h.b16 %v1083
    %v1230 = vunpack.c.l.b16 %v1084
    %v1231 = vunpack.c.h.b16 %v1084
    %v1232 = vunpack.c.l.b16 %v1085
    %v1233 = vunpack.c.h.b16 %v1085
    %v1234 = vunpack.c.l.b16 %v1086
    %v1235 = vunpack.c.h.b16 %v1086
    %v1236 = vunpack.c.l.b16 %v1087
    %v1237 = vunpack.c.h.b16 %v1087
    %v1238 = vunpack.c.l.b16 %v1088
    %v1239 = vunpack.c.h.b16 %v1088
    %v1240 = vunpack.c.l.b16 %v1089
    %v1241 = vunpack.c.h.b16 %v1089
    %v1242 = vunpack.c.l.b16 %v1090
    %v1243 = vunpack.c.h.b16 %v1090
    %v1244 = vunpack.c.l.b16 %v1091
    %v1245 = vunpack.c.h.b16 %v1091
    %v1246 = vunpack.c.l.b16 %v1092
    %v1247 = vunpack.c.h.b16 %v1092
    %v1248 = vunpack.c.l.b16 %v1093
    %v1249 = vunpack.c.h.b16 %v1093
    %v1250 = vunpack.c.l.b16 %v1094
    %v1251 = vunpack.c.h.b16 %v1094
    %v1252 = vunpack.c.l.b16 %v1095
    %v1253 = vunpack.c.h.b16 %v1095
    %v1254 = vunpack.c.l.b16 %v1096
    %v1255 = vunpack.c.h.b16 %v1096
    %v1256 = vunpack.c.l.b16 %v1097
    %v1257 = vunpack.c.h.b16 %v1097
    %v1258 = vunpack.c.l.b16 %v1098
    %v1259 = vunpack.c.h.b16 %v1098
    %v1260 = vunpack.c.l.b16 %v1099
    %v1261 = vunpack.c.h.b16 %v1099
    %v1262 = vunpack.c.l.b16 %v1100
    %v1263 = vunpack.c.h.b16 %v1100
    %v1264 = vunpack.c.l.b16 %v1101
    %v1265 = vunpack.c.h.b16 %v1101
    %v1266 = vunpack.c.l.b16 %v1102
    %v1267 = vunpack.c.h.b16 %v1102
    %v1268 = vunpack.c.l.b16 %v1103
    %v1269 = vunpack.c.h.b16 %v1103
    %v1270 = vunpack.c.l.b16 %v1104
    %v1271 = vunpack.c.h.b16 %v1104
    %v1272 = vunpack.c.l.b16 %v1105
    %v1273 = vunpack.c.h.b16 %v1105
    %v1274 = vunpack.c.l.b16 %v1106
    %v1275 = vunpack.c.h.b16 %v1106
    %v1276 = vunpack.c.l.b16 %v1107
    %v1277 = vunpack.c.h.b16 %v1107
    %v1278 = vunpack.c.l.b16 %v1108
    %v1279 = vunpack.c.h.b16 %v1108
    %v1280 = vunpack.c.l.b16 %v1109
    %v1281 = vunpack.c.h.b16 %v1109
    %v1282 = vunpack.c.l.b16 %v1110
    %v1283 = vunpack.c.h.b16 %v1110
    %v1284 = vunpack.c.l.b16 %v1111
    %v1285 = vunpack.c.h.b16 %v1111
    %v1286 = vunpack.c.l.b16 %v1112
    %v1287 = vunpack.c.h.b16 %v1112
    %v1288 = vunpack.c.l.b16 %v1113
    %v1289 = vunpack.c.h.b16 %v1113
    %v1290 = vunpack.c.l.b16 %v1114
    %v1291 = vunpack.c.h.b16 %v1114
    %v1292 = vunpack.c.l.b16 %v1115
    %v1293 = vunpack.c.h.b16 %v1115
    %v1294 = vunpack.c.l.b16 %v1116
    %v1295 = vunpack.c.h.b16 %v1116
    %v1296 = vunpack.c.l.b16 %v1117
    %v1297 = vunpack.c.h.b16 %v1117
    %v1298 = vunpack.c.l.b16 %v1118
    %v1299 = vunpack.c.h.b16 %v1118
    %v1300 = vunpack.c.l.b16 %v1119
    %v1301 = vunpack.c.h.b16 %v1119
    %v1302 = vunpack.c.l.b16 %v1120
    %v1303 = vunpack.c.h.b16 %v1120
    %v1304 = vunpack.c.l.b16 %v1121
    %v1305 = vunpack.c.h.b16 %v1121
    %v1306 = vunpack.c.l.b16 %v1122
    %v1307 = vunpack.c.h.b16 %v1122
    %v1308 = vunpack.c.l.b16 %v1123
    %v1309 = vunpack.c.h.b16 %v1123
    %v1310 = vunpack.c.l.b16 %v1124
    %v1311 = vunpack.c.h.b16 %v1124
    %v1312 = vunpack.c.l.b16 %v1125
    %v1313 = vunpack.c.h.b16 %v1125
    %v1314 = vunpack.c.l.b16 %v1126
    %v1315 = vunpack.c.h.b16 %v1126
    %v1316 = vunpack.c.l.b16 %v1127
    %v1317 = vunpack.c.h.b16 %v1127
    %v1318 = vunpack.c.l.b16 %v1128
    %v1319 = vunpack.c.h.b16 %v1128
    %v1320 = vunpack.c.l.b16 %v1129
    %v1321 = vunpack.c.h.b16 %v1129
    %v1322 = vunpack.c.l.b16 %v1130
    %v1323 = vunpack.c.h.b16 %v1130
    %v1324 = vunpack.c.l.b16 %v1131
    %v1325 = vunpack.c.h.b16 %v1131
    %v1326 = vunpack.c.l.b16 %v1132
    %v1327 = vunpack.c.h.b16 %v1132
    %v1328 = vunpack.c.l.b16 %v1133
    %v1329 = vunpack.c.h.b16 %v1133
    %v1330 = vunpack.c.l.b16 %v1134
    %v1331 = vunpack.c.h.b16 %v1134
    %v1332 = vunpack.c.l.b16 %v1135
    %v1333 = vunpack.c.h.b16 %v1135
    %v1334 = vunpack.c.l.b16 %v1136
    %v1335 = vunpack.c.h.b16 %v1136
    %v1336 = vunpack.c.l.b16 %v1137
    %v1337 = vunpack.c.h.b16 %v1137
    %v1338 = vunpack.c.l.b16 %v1138
    %v1339 = vunpack.c.h.b16 %v1138
    %v1340 = vunpack.c.l.b16 %v1139
    %v1341 = vunpack.c.h.b16 %v1139
    %v1342 = vunpack.c.l.b16 %v1140
    %v1343 = vunpack.c.h.b16 %v1140
    %v1344 = vunpack.c.l.b16 %v1141
    %v1345 = vunpack.c.h.b16 %v1141
    %v1346 = vpack.c.b16 %v1220, %v1218
    %v1347 = vpack.c.b16 %v1221, %v1219
    %v1348 = vpack.c.b16 %v1224, %v1222
    %v1349 = vpack.c.b16 %v1225, %v1223
    %v1350 = vpack.c.b16 %v1228, %v1226
    %v1351 = vpack.c.b16 %v1229, %v1227
    %v1352 = vpack.c.b16 %v1232, %v1230
    %v1353 = vpack.c.b16 %v1233, %v1231
    %v1354 = vpack.c.b16 %v1236, %v1234
    %v1355 = vpack.c.b16 %v1237, %v1235
    %v1356 = vpack.c.b16 %v1240, %v1238
    %v1357 = vpack.c.b16 %v1241, %v1239
    %v1358 = vpack.c.b16 %v1244, %v1242
    %v1359 = vpack.c.b16 %v1245, %v1243
    %v1360 = vpack.c.b16 %v1248, %v1246
    %v1361 = vpack.c.b16 %v1249, %v1247
    %v1362 = vpack.c.b16 %v1252, %v1250
    %v1363 = vpack.c.b16 %v1253, %v1251
    %v1364 = vpack.c.b16 %v1256, %v1254
    %v1365 = vpack.c.b16 %v1257, %v1255
    %v1366 = vpack.c.b16 %v1260, %v1258
    %v1367 = vpack.c.b16 %v1261, %v1259
    %v1368 = vpack.c.b16 %v1264, %v1262
    %v1369 = vpack.c.b16 %v1265, %v1263
    %v1370 = vpack.c.b16 %v1268, %v1266
    %v1371 = vpack.c.b16 %v1269, %v1267
    %v1372 = vpack.c.b16 %v1272, %v1270
    %v1373 = vpack.c.b16 %v1273, %v1271
    %v1374 = vpack.c.b16 %v1276, %v1274
    %v1375 = vpack.c.b16 %v1277, %v1275
    %v1376 = vpack.c.b16 %v1280, %v1278
    %v1377 = vpack.c.b16 %v1281, %v1279
    %v1378 = vpack.c.b16 %v1284, %v1282
    %v1379 = vpack.c.b16 %v1285, %v1283
    %v1380 = vpack.c.b16 %v1288, %v1286
    %v1381 = vpack.c.b16 %v1289, %v1287
    %v1382 = vpack.c.b16 %v1292, %v1290
    %v1383 = vpack.c.b16 %v1293, %v1291
    %v1384 = vpack.c.b16 %v1296, %v1294
    %v1385 = vpack.c.b16 %v1297, %v1295
    %v1386 = vpack.c.b16 %v1300, %v1298
    %v1387 = vpack.c.b16 %v1301, %v1299
    %v1388 = vpack.c.b16 %v1304, %v1302
    %v1389 = vpack.c.b16 %v1305, %v1303
    %v1390 = vpack.c.b16 %v1308, %v1306
    %v1391 = vpack.c.b16 %v1309, %v1307
    %v1392 = vpack.c.b16 %v1312, %v1310
    %v1393 = vpack.c.b16 %v1313, %v1311
    %v1394 = vpack.c.b16 %v1316, %v1314
    %v1395 = vpack.c.b16 %v1317, %v1315
    %v1396 = vpack.c.b16 %v1320, %v1318
    %v1397 = vpack.c.b16 %v1321, %v1319
    %v1398 = vpack.c.b16 %v1324, %v1322
    %v1399 = vpack.c.b16 %v1325, %v1323
    %v1400 = vpack.c.b16 %v1328, %v1326
    %v1401 = vpack.c.b16 %v1329, %v1327
    %v1402 = vpack.c.b16 %v1332, %v1330
    %v1403 = vpack.c.b16 %v1333, %v1331
    %v1404 = vpack.c.b16 %v1336, %v1334
    %v1405 = vpack.c.b16 %v1337, %v1335
    %v1406 = vpack.c.b16 %v1340, %v1338
    %v1407 = vpack.c.b16 %v1341, %v1339
    %v1408 = vpack.c.b16 %v1344, %v1342
    %v1409 = vpack.c.b16 %v1345, %v1343
    %1474 = vmatprep.subr.bf16.mxu0 %v1347
    %1475 = vmatpush1.bf16.msra.mxu0 %v1346
    %1476 = vmatprep.subr.bf16.mxu0 %v1349
    %1477 = vmatpush1.bf16.msra.mxu0 %v1348
    %1478 = vmatprep.subr.bf16.mxu0 %v1351
    %1479 = vmatpush1.bf16.msra.mxu0 %v1350
    %1480 = vmatprep.subr.bf16.mxu0 %v1353
    %1481 = vmatpush1.bf16.msra.mxu0 %v1352
    %1482 = vmatprep.subr.bf16.mxu0 %v1355
    %1483 = vmatpush1.bf16.msra.mxu0 %v1354
    %1484 = vmatprep.subr.bf16.mxu0 %v1357
    %1485 = vmatpush1.bf16.msra.mxu0 %v1356
    %1486 = vmatprep.subr.bf16.mxu0 %v1359
    %1487 = vmatpush1.bf16.msra.mxu0 %v1358
    %1488 = vmatprep.subr.bf16.mxu0 %v1361
    %1489 = vmatpush1.bf16.msra.mxu0 %v1360
    %1490 = vmatprep.subr.bf16.mxu0 %v1363
    %1491 = vmatpush1.bf16.msra.mxu0 %v1362
    %1492 = vmatprep.subr.bf16.mxu0 %v1365
    %1493 = vmatpush1.bf16.msra.mxu0 %v1364
    %1494 = vmatprep.subr.bf16.mxu0 %v1367
    %1495 = vmatpush1.bf16.msra.mxu0 %v1366
    %1496 = vmatprep.subr.bf16.mxu0 %v1369
    %1497 = vmatpush1.bf16.msra.mxu0 %v1368
    %1498 = vmatprep.subr.bf16.mxu0 %v1371
    %1499 = vmatpush1.bf16.msra.mxu0 %v1370
    %1500 = vmatprep.subr.bf16.mxu0 %v1373
    %1501 = vmatpush1.bf16.msra.mxu0 %v1372
    %1502 = vmatprep.subr.bf16.mxu0 %v1375
    %1503 = vmatpush1.bf16.msra.mxu0 %v1374
    %1504 = vmatprep.subr.bf16.mxu0 %v1377
    %1505 = vmatpush1.bf16.msra.mxu0 %v1376
    %1506 = vmatprep.mubr.bf16.mxu0 %v1075
    %1507 = vmatmul.mubr.bf16.gmra.mrb[0].mxu0 %v1074
    %v1508 = vpop.f32.mrb[0].mxu0
    %v1509 = vadd.f32 %v1147, %v1508
    %v1510 = vpop.f32.mrb[0].mxu0
    %v1511 = vadd.f32 %v1151, %v1510
    %v1512 = vpop.f32.mrb[0].mxu0
    %v1513 = vpop.f32.mrb[0].mxu0
    %1514 = vdwg.mxu0
    %1515 = vmatprep.subr.bf16.mxu0 %v1379
    %1516 = vmatpush1.bf16.msra.mxu0 %v1378
    %1517 = vmatprep.subr.bf16.mxu0 %v1381
    %1518 = vmatpush1.bf16.msra.mxu0 %v1380
    %1519 = vmatprep.subr.bf16.mxu0 %v1383
    %1520 = vmatpush1.bf16.msra.mxu0 %v1382
    %1521 = vmatprep.subr.bf16.mxu0 %v1385
    %1522 = vmatpush1.bf16.msra.mxu0 %v1384
    %1523 = vmatprep.subr.bf16.mxu0 %v1387
    %1524 = vmatpush1.bf16.msra.mxu0 %v1386
    %1525 = vmatprep.subr.bf16.mxu0 %v1389
    %1526 = vmatpush1.bf16.msra.mxu0 %v1388
    %1527 = vmatprep.subr.bf16.mxu0 %v1391
    %1528 = vmatpush1.bf16.msra.mxu0 %v1390
    %1529 = vmatprep.subr.bf16.mxu0 %v1393
    %1530 = vmatpush1.bf16.msra.mxu0 %v1392
    %1531 = vmatprep.subr.bf16.mxu0 %v1395
    %1532 = vmatpush1.bf16.msra.mxu0 %v1394
    %1533 = vmatprep.subr.bf16.mxu0 %v1397
    %1534 = vmatpush1.bf16.msra.mxu0 %v1396
    %1535 = vmatprep.subr.bf16.mxu0 %v1399
    %1536 = vmatpush1.bf16.msra.mxu0 %v1398
    %1537 = vmatprep.subr.bf16.mxu0 %v1401
    %1538 = vmatpush1.bf16.msra.mxu0 %v1400
    %1539 = vmatprep.subr.bf16.mxu0 %v1403
    %1540 = vmatpush1.bf16.msra.mxu0 %v1402
    %1541 = vmatprep.subr.bf16.mxu0 %v1405
    %1542 = vmatpush1.bf16.msra.mxu0 %v1404
    %1543 = vmatprep.subr.bf16.mxu0 %v1407
    %1544 = vmatpush1.bf16.msra.mxu0 %v1406
    %1545 = vmatprep.subr.bf16.mxu0 %v1409
    %1546 = vmatpush1.bf16.msra.mxu0 %v1408
    %1547 = vmatprep.mubr.bf16.mxu0 %v1077
    %1548 = vmatmul.mubr.bf16.gmra.mrb[0].mxu0 %v1076
    %v1549 = vpop.f32.mrb[0].mxu0
    %v1550 = vadd.f32 %v1509, %v1549
    %v1551 = vpop.f32.mrb[0].mxu0
    %v1552 = vadd.f32 %v1511, %v1551
    %v1553 = vpop.f32.mrb[0].mxu0
    %v1554 = vpop.f32.mrb[0].mxu0
    %1555 = vdwg.mxu0
    %v1556 = vmax.f32 %v1550, 0.0
    %v1557 = vmax.f32 %v1552, 0.0
    %v1558 = vpack.c.bf16 %v1556, %v1556
    %v1559 = vpack.c.bf16 %v1557, %v1557
    %v1560 = vld [vmem:[#allocation8] sm:$0xff]
    %v1561 = vld [vmem:[#allocation8 + $0x8] sm:$0xff]
    %v1562 = vld [vmem:[#allocation8 + $0x10] sm:$0xff]
    %v1563 = vld [vmem:[#allocation8 + $0x18] sm:$0xff]
    %v1564 = vld [vmem:[#allocation8 + $0x20] sm:$0xff]
    %v1565 = vld [vmem:[#allocation8 + $0x28] sm:$0xff]
    %v1566 = vld [vmem:[#allocation8 + $0x30] sm:$0xff]
    %v1567 = vld [vmem:[#allocation8 + $0x38] sm:$0xff]
    %v1568 = vld [vmem:[#allocation8 + $0x40] sm:$0xff]
    %v1569 = vld [vmem:[#allocation8 + $0x48] sm:$0xff]
    %v1570 = vld [vmem:[#allocation8 + $0x50] sm:$0xff]
    %v1571 = vld [vmem:[#allocation8 + $0x58] sm:$0xff]
    %v1572 = vld [vmem:[#allocation8 + $0x60] sm:$0xff]
    %v1573 = vld [vmem:[#allocation8 + $0x68] sm:$0xff]
    %v1574 = vld [vmem:[#allocation8 + $0x70] sm:$0xff]
    %v1575 = vld [vmem:[#allocation8 + $0x78] sm:$0xff]
    %v1576 = vld [vmem:[#allocation8 + $0x80] sm:$0xff]
    %v1577 = vld [vmem:[#allocation8 + $0x88] sm:$0xff]
    %v1578 = vld [vmem:[#allocation8 + $0x90] sm:$0xff]
    %v1579 = vld [vmem:[#allocation8 + $0x98] sm:$0xff]
    %v1580 = vld [vmem:[#allocation8 + $0xa0] sm:$0xff]
    %v1581 = vld [vmem:[#allocation8 + $0xa8] sm:$0xff]
    %v1582 = vld [vmem:[#allocation8 + $0xb0] sm:$0xff]
    %v1583 = vld [vmem:[#allocation8 + $0xb8] sm:$0xff]
    %v1584 = vld [vmem:[#allocation8 + $0xc0] sm:$0xff]
    %v1585 = vld [vmem:[#allocation8 + $0xc8] sm:$0xff]
    %v1586 = vld [vmem:[#allocation8 + $0xd0] sm:$0xff]
    %v1587 = vld [vmem:[#allocation8 + $0xd8] sm:$0xff]
    %v1588 = vld [vmem:[#allocation8 + $0xe0] sm:$0xff]
    %v1589 = vld [vmem:[#allocation8 + $0xe8] sm:$0xff]
    %v1590 = vld [vmem:[#allocation8 + $0xf0] sm:$0xff]
    %v1591 = vld [vmem:[#allocation8 + $0xf8] sm:$0xff]
    %v1592 = vld [vmem:[%s6] sm:$0x3]
    %v1594 = vlaneseq
    %v1595 = vshrl.u32 %v1594, 7
    %v1596 = vsub.s32 0, %v1595
    %v1597 = vrot.slane %v1592, %v1596
    %v1598 = vlaneseq
    %v1599 = vshrl.u32 %v1598, 7
    %v1600 = vsub.s32 1, %v1599
    %v1601 = vrot.slane %v1592, %v1600
    %v1636 = vunpack.c.l.b16 %v1560
    %v1637 = vunpack.c.h.b16 %v1560
    %v1638 = vunpack.c.l.b16 %v1561
    %v1639 = vunpack.c.h.b16 %v1561
    %v1640 = vunpack.c.l.b16 %v1562
    %v1641 = vunpack.c.h.b16 %v1562
    %v1642 = vunpack.c.l.b16 %v1563
    %v1643 = vunpack.c.h.b16 %v1563
    %v1644 = vunpack.c.l.b16 %v1564
    %v1645 = vunpack.c.h.b16 %v1564
    %v1646 = vunpack.c.l.b16 %v1565
    %v1647 = vunpack.c.h.b16 %v1565
    %v1648 = vunpack.c.l.b16 %v1566
    %v1649 = vunpack.c.h.b16 %v1566
    %v1650 = vunpack.c.l.b16 %v1567
    %v1651 = vunpack.c.h.b16 %v1567
    %v1652 = vunpack.c.l.b16 %v1568
    %v1653 = vunpack.c.h.b16 %v1568
    %v1654 = vunpack.c.l.b16 %v1569
    %v1655 = vunpack.c.h.b16 %v1569
    %v1656 = vunpack.c.l.b16 %v1570
    %v1657 = vunpack.c.h.b16 %v1570
    %v1658 = vunpack.c.l.b16 %v1571
    %v1659 = vunpack.c.h.b16 %v1571
    %v1660 = vunpack.c.l.b16 %v1572
    %v1661 = vunpack.c.h.b16 %v1572
    %v1662 = vunpack.c.l.b16 %v1573
    %v1663 = vunpack.c.h.b16 %v1573
    %v1664 = vunpack.c.l.b16 %v1574
    %v1665 = vunpack.c.h.b16 %v1574
    %v1666 = vunpack.c.l.b16 %v1575
    %v1667 = vunpack.c.h.b16 %v1575
    %v1668 = vunpack.c.l.b16 %v1576
    %v1669 = vunpack.c.h.b16 %v1576
    %v1670 = vunpack.c.l.b16 %v1577
    %v1671 = vunpack.c.h.b16 %v1577
    %v1672 = vunpack.c.l.b16 %v1578
    %v1673 = vunpack.c.h.b16 %v1578
    %v1674 = vunpack.c.l.b16 %v1579
    %v1675 = vunpack.c.h.b16 %v1579
    %v1676 = vunpack.c.l.b16 %v1580
    %v1677 = vunpack.c.h.b16 %v1580
    %v1678 = vunpack.c.l.b16 %v1581
    %v1679 = vunpack.c.h.b16 %v1581
    %v1680 = vunpack.c.l.b16 %v1582
    %v1681 = vunpack.c.h.b16 %v1582
    %v1682 = vunpack.c.l.b16 %v1583
    %v1683 = vunpack.c.h.b16 %v1583
    %v1684 = vunpack.c.l.b16 %v1584
    %v1685 = vunpack.c.h.b16 %v1584
    %v1686 = vunpack.c.l.b16 %v1585
    %v1687 = vunpack.c.h.b16 %v1585
    %v1688 = vunpack.c.l.b16 %v1586
    %v1689 = vunpack.c.h.b16 %v1586
    %v1690 = vunpack.c.l.b16 %v1587
    %v1691 = vunpack.c.h.b16 %v1587
    %v1692 = vunpack.c.l.b16 %v1588
    %v1693 = vunpack.c.h.b16 %v1588
    %v1694 = vunpack.c.l.b16 %v1589
    %v1695 = vunpack.c.h.b16 %v1589
    %v1696 = vunpack.c.l.b16 %v1590
    %v1697 = vunpack.c.h.b16 %v1590
    %v1698 = vunpack.c.l.b16 %v1591
    %v1699 = vunpack.c.h.b16 %v1591
    %v1700 = vpack.c.b16 %v1638, %v1636
    %v1701 = vpack.c.b16 %v1639, %v1637
    %v1702 = vpack.c.b16 %v1642, %v1640
    %v1703 = vpack.c.b16 %v1643, %v1641
    %v1704 = vpack.c.b16 %v1646, %v1644
    %v1705 = vpack.c.b16 %v1647, %v1645
    %v1706 = vpack.c.b16 %v1650, %v1648
    %v1707 = vpack.c.b16 %v1651, %v1649
    %v1708 = vpack.c.b16 %v1654, %v1652
    %v1709 = vpack.c.b16 %v1655, %v1653
    %v1710 = vpack.c.b16 %v1658, %v1656
    %v1711 = vpack.c.b16 %v1659, %v1657
    %v1712 = vpack.c.b16 %v1662, %v1660
    %v1713 = vpack.c.b16 %v1663, %v1661
    %v1714 = vpack.c.b16 %v1666, %v1664
    %v1715 = vpack.c.b16 %v1667, %v1665
    %v1716 = vpack.c.b16 %v1670, %v1668
    %v1717 = vpack.c.b16 %v1671, %v1669
    %v1718 = vpack.c.b16 %v1674, %v1672
    %v1719 = vpack.c.b16 %v1675, %v1673
    %v1720 = vpack.c.b16 %v1678, %v1676
    %v1721 = vpack.c.b16 %v1679, %v1677
    %v1722 = vpack.c.b16 %v1682, %v1680
    %v1723 = vpack.c.b16 %v1683, %v1681
    %v1724 = vpack.c.b16 %v1686, %v1684
    %v1725 = vpack.c.b16 %v1687, %v1685
    %v1726 = vpack.c.b16 %v1690, %v1688
    %v1727 = vpack.c.b16 %v1691, %v1689
    %v1728 = vpack.c.b16 %v1694, %v1692
    %v1729 = vpack.c.b16 %v1695, %v1693
    %v1730 = vpack.c.b16 %v1698, %v1696
    %v1731 = vpack.c.b16 %v1699, %v1697
    %1764 = vmatprep.subr.bf16.mxu0 %v1701
    %1765 = vmatpush1.bf16.msra.mxu0 %v1700
    %1766 = vmatprep.subr.bf16.mxu0 %v1703
    %1767 = vmatpush1.bf16.msra.mxu0 %v1702
    %1768 = vmatprep.subr.bf16.mxu0 %v1705
    %1769 = vmatpush1.bf16.msra.mxu0 %v1704
    %1770 = vmatprep.subr.bf16.mxu0 %v1707
    %1771 = vmatpush1.bf16.msra.mxu0 %v1706
    %1772 = vmatprep.subr.bf16.mxu0 %v1709
    %1773 = vmatpush1.bf16.msra.mxu0 %v1708
    %1774 = vmatprep.subr.bf16.mxu0 %v1711
    %1775 = vmatpush1.bf16.msra.mxu0 %v1710
    %1776 = vmatprep.subr.bf16.mxu0 %v1713
    %1777 = vmatpush1.bf16.msra.mxu0 %v1712
    %1778 = vmatprep.subr.bf16.mxu0 %v1715
    %1779 = vmatpush1.bf16.msra.mxu0 %v1714
    %1780 = vmatprep.subr.bf16.mxu0 %v1717
    %1781 = vmatpush1.bf16.msra.mxu0 %v1716
    %1782 = vmatprep.subr.bf16.mxu0 %v1719
    %1783 = vmatpush1.bf16.msra.mxu0 %v1718
    %1784 = vmatprep.subr.bf16.mxu0 %v1721
    %1785 = vmatpush1.bf16.msra.mxu0 %v1720
    %1786 = vmatprep.subr.bf16.mxu0 %v1723
    %1787 = vmatpush1.bf16.msra.mxu0 %v1722
    %1788 = vmatprep.subr.bf16.mxu0 %v1725
    %1789 = vmatpush1.bf16.msra.mxu0 %v1724
    %1790 = vmatprep.subr.bf16.mxu0 %v1727
    %1791 = vmatpush1.bf16.msra.mxu0 %v1726
    %1792 = vmatprep.subr.bf16.mxu0 %v1729
    %1793 = vmatpush1.bf16.msra.mxu0 %v1728
    %1794 = vmatprep.subr.bf16.mxu0 %v1731
    %1795 = vmatpush1.bf16.msra.mxu0 %v1730
    %1796 = vmatprep.mubr.bf16.mxu0 %v1559
    %1797 = vmatmul.mubr.bf16.gmra.mrb[0].mxu0 %v1558
    %v1798 = vpop.f32.mrb[0].mxu0
    %v1799 = vadd.f32 %v1597, %v1798
    %v1800 = vpop.f32.mrb[0].mxu0
    %v1801 = vadd.f32 %v1601, %v1800
    %v1802 = vpop.f32.mrb[0].mxu0
    %v1803 = vpop.f32.mrb[0].mxu0
    %1804 = vdwg.mxu0
    %v1805 = vmax.f32 %v1799, 0.0
    %v1806 = vmax.f32 %v1801, 0.0
    %v1807 = vpack.c.bf16 %v1805, %v1805
    %v1808 = vpack.c.bf16 %v1806, %v1806
    %v1809 = vld [vmem:[#allocation10] sm:$0xf]
    %v1810 = vld [vmem:[#allocation10 + $0x4] sm:$0xf]
    %v1811 = vld [vmem:[#allocation10 + $0x8] sm:$0xf]
    %v1812 = vld [vmem:[#allocation10 + $0xc] sm:$0xf]
    %v1813 = vld [vmem:[#allocation10 + $0x10] sm:$0xf]
    %v1814 = vld [vmem:[#allocation10 + $0x14] sm:$0xf]
    %v1815 = vld [vmem:[#allocation10 + $0x18] sm:$0xf]
    %v1816 = vld [vmem:[#allocation10 + $0x1c] sm:$0xf]
    %v1817 = vld [vmem:[#allocation10 + $0x20] sm:$0xf]
    %v1818 = vld [vmem:[#allocation10 + $0x24] sm:$0xf]
    %v1819 = vld [vmem:[#allocation10 + $0x28] sm:$0xf]
    %v1820 = vld [vmem:[#allocation10 + $0x2c] sm:$0xf]
    %v1821 = vld [vmem:[#allocation10 + $0x30] sm:$0xf]
    %v1822 = vld [vmem:[#allocation10 + $0x34] sm:$0xf]
    %v1823 = vld [vmem:[#allocation10 + $0x38] sm:$0xf]
    %v1824 = vld [vmem:[#allocation10 + $0x3c] sm:$0xf]
    %v1825 = vld [vmem:[#allocation10 + $0x40] sm:$0xf]
    %v1826 = vld [vmem:[#allocation10 + $0x44] sm:$0xf]
    %v1827 = vld [vmem:[#allocation10 + $0x48] sm:$0xf]
    %v1828 = vld [vmem:[#allocation10 + $0x4c] sm:$0xf]
    %v1829 = vld [vmem:[#allocation10 + $0x50] sm:$0xf]
    %v1830 = vld [vmem:[#allocation10 + $0x54] sm:$0xf]
    %v1831 = vld [vmem:[#allocation10 + $0x58] sm:$0xf]
    %v1832 = vld [vmem:[#allocation10 + $0x5c] sm:$0xf]
    %v1833 = vld [vmem:[#allocation10 + $0x60] sm:$0xf]
    %v1834 = vld [vmem:[#allocation10 + $0x64] sm:$0xf]
    %v1835 = vld [vmem:[#allocation10 + $0x68] sm:$0xf]
    %v1836 = vld [vmem:[#allocation10 + $0x6c] sm:$0xf]
    %v1837 = vld [vmem:[#allocation10 + $0x70] sm:$0xf]
    %v1838 = vld [vmem:[#allocation10 + $0x74] sm:$0xf]
    %v1839 = vld [vmem:[#allocation10 + $0x78] sm:$0xf]
    %v1840 = vld [vmem:[#allocation10 + $0x7c] sm:$0xf]
    %v1873 = vunpack.c.l.b16 %v1809
    %v1874 = vunpack.c.l.b16 %v1810
    %v1875 = vunpack.c.l.b16 %v1811
    %v1876 = vunpack.c.l.b16 %v1812
    %v1877 = vunpack.c.l.b16 %v1813
    %v1878 = vunpack.c.l.b16 %v1814
    %v1879 = vunpack.c.l.b16 %v1815
    %v1880 = vunpack.c.l.b16 %v1816
    %v1881 = vunpack.c.l.b16 %v1817
    %v1882 = vunpack.c.l.b16 %v1818
    %v1883 = vunpack.c.l.b16 %v1819
    %v1884 = vunpack.c.l.b16 %v1820
    %v1885 = vunpack.c.l.b16 %v1821
    %v1886 = vunpack.c.l.b16 %v1822
    %v1887 = vunpack.c.l.b16 %v1823
    %v1888 = vunpack.c.l.b16 %v1824
    %v1889 = vunpack.c.l.b16 %v1825
    %v1890 = vunpack.c.l.b16 %v1826
    %v1891 = vunpack.c.l.b16 %v1827
    %v1892 = vunpack.c.l.b16 %v1828
    %v1893 = vunpack.c.l.b16 %v1829
    %v1894 = vunpack.c.l.b16 %v1830
    %v1895 = vunpack.c.l.b16 %v1831
    %v1896 = vunpack.c.l.b16 %v1832
    %v1897 = vunpack.c.l.b16 %v1833
    %v1898 = vunpack.c.l.b16 %v1834
    %v1899 = vunpack.c.l.b16 %v1835
    %v1900 = vunpack.c.l.b16 %v1836
    %v1901 = vunpack.c.l.b16 %v1837
    %v1902 = vunpack.c.l.b16 %v1838
    %v1903 = vunpack.c.l.b16 %v1839
    %v1904 = vunpack.c.l.b16 %v1840
    %v1905 = vpack.c.b16 %v1874, %v1873
    %v1906 = vpack.c.b16 %v1876, %v1875
    %v1907 = vpack.c.b16 %v1878, %v1877
    %v1908 = vpack.c.b16 %v1880, %v1879
    %v1909 = vpack.c.b16 %v1882, %v1881
    %v1910 = vpack.c.b16 %v1884, %v1883
    %v1911 = vpack.c.b16 %v1886, %v1885
    %v1912 = vpack.c.b16 %v1888, %v1887
    %v1913 = vpack.c.b16 %v1890, %v1889
    %v1914 = vpack.c.b16 %v1892, %v1891
    %v1915 = vpack.c.b16 %v1894, %v1893
    %v1916 = vpack.c.b16 %v1896, %v1895
    %v1917 = vpack.c.b16 %v1898, %v1897
    %v1918 = vpack.c.b16 %v1900, %v1899
    %v1919 = vpack.c.b16 %v1902, %v1901
    %v1920 = vpack.c.b16 %v1904, %v1903
    %1937 = vmatprep.subr.bf16.mxu0 0
    %1938 = vmatpush1.bf16.msra.mxu0 %v1905
    %1939 = vmatprep.subr.bf16.mxu0 0
    %1940 = vmatpush1.bf16.msra.mxu0 %v1906
    %1941 = vmatprep.subr.bf16.mxu0 0
    %1942 = vmatpush1.bf16.msra.mxu0 %v1907
    %1943 = vmatprep.subr.bf16.mxu0 0
    %1944 = vmatpush1.bf16.msra.mxu0 %v1908
    %1945 = vmatprep.subr.bf16.mxu0 0
    %1946 = vmatpush1.bf16.msra.mxu0 %v1909
    %1947 = vmatprep.subr.bf16.mxu0 0
    %1948 = vmatpush1.bf16.msra.mxu0 %v1910
    %1949 = vmatprep.subr.bf16.mxu0 0
    %1950 = vmatpush1.bf16.msra.mxu0 %v1911
    %1951 = vmatprep.subr.bf16.mxu0 0
    %1952 = vmatpush1.bf16.msra.mxu0 %v1912
    %1953 = vmatprep.subr.bf16.mxu0 0
    %1954 = vmatpush1.bf16.msra.mxu0 %v1913
    %1955 = vmatprep.subr.bf16.mxu0 0
    %1956 = vmatpush1.bf16.msra.mxu0 %v1914
    %1957 = vmatprep.subr.bf16.mxu0 0
    %1958 = vmatpush1.bf16.msra.mxu0 %v1915
    %1959 = vmatprep.subr.bf16.mxu0 0
    %1960 = vmatpush1.bf16.msra.mxu0 %v1916
    %1961 = vmatprep.subr.bf16.mxu0 0
    %1962 = vmatpush1.bf16.msra.mxu0 %v1917
    %1963 = vmatprep.subr.bf16.mxu0 0
    %1964 = vmatpush1.bf16.msra.mxu0 %v1918
    %1965 = vmatprep.subr.bf16.mxu0 0
    %1966 = vmatpush1.bf16.msra.mxu0 %v1919
    %1967 = vmatprep.subr.bf16.mxu0 0
    %1968 = vmatpush1.bf16.msra.mxu0 %v1920
    %1969 = vmatprep.mubr.bf16.mxu0 %v1808
    %1970 = vmatmul.mubr.bf16.gmra.mrb[0].mxu0 %v1807
    %v1971 = vpop.f32.mrb[0].mxu0
    %v1972 = vadd.f32 0.0, %v1971
    %v1973 = vpop.f32.mrb[0].mxu0
    %v1974 = vpop.f32.mrb[0].mxu0
    %v1975 = vpop.f32.mrb[0].mxu0
    %1976 = vdwg.mxu0
    %1977 = vst [vmem:[#allocation11] sm:$0xff] %v1805
    %1978 = vst [vmem:[#allocation11 + $0x8] sm:$0xff] %v1806
    %1979 = vst [vmem:[#allocation12] sm:$0xff] %v1972
    // Predicated region
    $region54: #{tpu_custom_call.1} parent=1 // pred_check
      _
    $region55: #{tpu_custom_call.1} parent=1 // pred_check_branch
      %1981 = sbr.rel (0) target = $region57
    $region56: #{tpu_custom_call.1} parent=1 // pred_region
      %s1983 = ssub.s32 256, 256
      %1984 = vsyncadd [#allocation4], %s1983
      %s1986 = sshll.u32 [#allocation11], 4
      %s1987 = int_to_ptr.vmem [resolvable:$true] %s1986
      %1989 = dma.vmem_to_hbm [thread:$0]  %s1987, 256, %s8, [#allocation4]
    $region57: #{tpu_custom_call.1} parent=1 // pred_fallthru
      _
    // Predicated region
    $region58: #{tpu_custom_call.1} parent=1 // pred_check
      _
    $region59: #{tpu_custom_call.1} parent=1 // pred_check_branch
      %1991 = sbr.rel (0) target = $region61
    $region60: #{tpu_custom_call.1} parent=1 // pred_region
      %s1993 = ssub.s32 128, 128
      %1994 = vsyncadd [#allocation13], %s1993
      %s1996 = sshll.u32 [#allocation12], 4
      %s1997 = int_to_ptr.vmem [resolvable:$true] %s1996
      %1999 = dma.vmem_to_hbm [thread:$0]  %s1997, 128, %s9, [#allocation13]
    $region61: #{tpu_custom_call.1} parent=1 // pred_fallthru
      _
    // Predicated region
    $region62: #{tpu_custom_call.1} parent=1 // pred_check
      _
    $region63: #{tpu_custom_call.1} parent=1 // pred_check_branch
      %2001 = sbr.rel (0) target = $region65
    $region64: #{tpu_custom_call.1} parent=1 // pred_region
      %2002 = dma.done [#allocation4], 256
    $region65: #{tpu_custom_call.1} parent=1 // pred_fallthru
      _
    // Predicated region
    $region66: #{tpu_custom_call.1} parent=1 // pred_check
      _
    $region67: #{tpu_custom_call.1} parent=1 // pred_check_branch
      %2004 = sbr.rel (0) target = $region69
    $region68: #{tpu_custom_call.1} parent=1 // pred_region
      %2005 = dma.done [#allocation13], 128
    $region69: #{tpu_custom_call.1} parent=1 // pred_fallthru
      _
    %2006 = vsyncpa [#allocation3], 1
    %2007 = vsyncpa [#allocation6], 1
    %2008 = vsyncpa [#allocation9], 1
    %2009 = vsyncpa [#allocation4], 1
    %2010 = vsyncpa [#allocation13], 1

</llo_original>
